<compile_context>
chip_gen: v7x
topology: tpu7x:2x2x1
jax: 0.10.0
libtpu: 0.0.40
codegen_flags: <defaults>
</compile_context>

<pallas_src>
import functools

import jax
import jax.numpy as jnp
from jax.experimental import pallas as pl
from jax.experimental.pallas import tpu as pltpu

NEG_SLOPE = 0.01   # torch default LeakyReLU slope
LN_EPS = 1e-5      # torch default LayerNorm eps


def _leaky_relu(x):
    return jnp.where(x > 0, x, NEG_SLOPE * x)


def _layer_norm(x, gamma, beta):
    mu = jnp.mean(x, axis=-1, keepdims=True)
    var = jnp.mean(jnp.square(x - mu), axis=-1, keepdims=True)
    inv = jax.lax.rsqrt(var + LN_EPS)
    return (x - mu) * inv * gamma + beta


def home_decoder_kernel(traj_ref, diff_ref, w1_ref, w2e_ref, w2d_ref, w3_ref,
                        vec_ref, out_ref, *, K, H2):
    """One batch tile: fused encoder + decoder.

    traj_ref : (TB, Din)      flattened history
    diff_ref : (TB, 2*K)      [dx_0..dx_{K-1}, dy_0..dy_{K-1}] per row
    out_ref  : (TB, K*H2)     trajectories, K candidates concatenated on lanes
    """
    E = w1_ref.shape[1]
    H = w2e_ref.shape[1]

    # Packed (1, N) parameter vectors: static slices of a single DMA'd array.
    b1, g1, be1 = vec_ref[0:1, :E], vec_ref[1:2, :E], vec_ref[2:3, :E]
    b2, g2, be2 = vec_ref[3:4, :H], vec_ref[4:5, :H], vec_ref[5:6, :H]
    b3 = vec_ref[6:7, :H2]

    # ---- traj_encoder: Flatten -> Linear(Din, E) -> LayerNorm -> LeakyReLU ----
    emb = jnp.dot(traj_ref[...], w1_ref[...],
                  preferred_element_type=jnp.float32) + b1                # (TB, E)
    emb = _leaky_relu(_layer_norm(emb, g1, be1))

    # ---- traj_decoder stage 1, emb part of the split Linear(E + 2, H) ----
    # cat(emb, diff) @ W2  ==  emb @ W2[:E]  +  diff @ W2[E:]
    h_emb = jnp.dot(emb, w2e_ref[...],
                    preferred_element_type=jnp.float32) + b2              # (TB, H)

    w2d = w2d_ref[...]                                                    # (2, H)
    w3 = w3_ref[...]                                                      # (H, H2)
    d = diff_ref[...]                                                     # (TB, 2K)
    dx = d[:, :K]                                                         # (TB, K)
    dy = d[:, K:2 * K]                                                    # (TB, K)

    # ---- unrolled loop over the K diff candidates (K is tiny) ----
    for k in range(K):
        h = (h_emb
             + dx[:, k:k + 1] * w2d[0:1, :]
             + dy[:, k:k + 1] * w2d[1:2, :])                              # (TB, H)
        h = _leaky_relu(_layer_norm(h, g2, be2))
        o = jnp.dot(h, w3, preferred_element_type=jnp.float32) + b3       # (TB, H2)
        out_ref[:, k * H2:(k + 1) * H2] = o.astype(out_ref.dtype)


def home_mlp_decoder(traj_hist, diff, params, *, block_b=512):
    """traj_hist: (B, T, F) f32, diff: (B, K, 2) f32 -> (B, K, horizon*2) f32."""
    B, T, F = traj_hist.shape
    K = diff.shape[1]
    Din = T * F
    E = params['w1'].shape[1]
    H = params['w2e'].shape[1]
    H2 = params['w3'].shape[1]
    VW = 128
    assert E <= VW and H <= VW and H2 <= VW

    # Pack the seven (1, N) vectors into one (8, 128) array -> one DMA.
    vec = jnp.zeros((8, VW), jnp.float32)
    vec = vec.at[0, :E].set(params['b1'][0])
    vec = vec.at[1, :E].set(params['g1'][0])
    vec = vec.at[2, :E].set(params['be1'][0])
    vec = vec.at[3, :H].set(params['b2'][0])
    vec = vec.at[4, :H].set(params['g2'][0])
    vec = vec.at[5, :H].set(params['be2'][0])
    vec = vec.at[6, :H2].set(params['b3'][0])

    traj_flat = traj_hist.reshape(B, Din)                       # nn.Flatten(1), f32
    # (B, K, 2) -> (B, 2, K) -> (B, 2*K): dx then dy, contiguous lane slices.
    diff2d = jnp.transpose(diff, (0, 2, 1)).reshape(B, 2 * K)

    # ---- batch tile selection ----
    if B <= 8:
        TB = B                                  # single step; block == full array
    else:
        # Multiple of 8, capped by block_b, and >= 2 grid steps so both
        # v7x TensorCores get work under dimension_semantics=("parallel",).
        TB = min(block_b, max(8, (pl.cdiv(B, 2) // 8) * 8))
    Bp = pl.cdiv(B, TB) * TB
    if Bp != B:
        traj_flat = jnp.pad(traj_flat, ((0, Bp - B), (0, 0)))
        diff2d = jnp.pad(diff2d, ((0, Bp - B), (0, 0)))

    # Advisory scheduling hint: the kernel is small and HBM-bound.
    flops = 2 * B * (Din * E + E * H + K * H * H2)
    bytes_accessed = 4 * (B * (Din + 2 * K + K * H2)
                          + Din * E + E * H + 2 * H + H * H2 + 8 * VW)
    cost = pl.CostEstimate(flops=flops,
                           transcendentals=B * (1 + K),
                           bytes_accessed=bytes_accessed)

    kernel = functools.partial(home_decoder_kernel, K=K, H2=H2)

    out2d = pl.pallas_call(
        kernel,
        out_shape=jax.ShapeDtypeStruct((Bp, K * H2), jnp.float32),
        grid=(Bp // TB,),
        in_specs=[
            pl.BlockSpec((TB, Din), lambda i: (i, 0)),       # traj: tiled on B
            pl.BlockSpec((TB, 2 * K), lambda i: (i, 0)),     # diff: tiled on B
            pl.BlockSpec((Din, E), lambda i: (0, 0)),        # weights: resident
            pl.BlockSpec((E, H), lambda i: (0, 0)),
            pl.BlockSpec((2, H), lambda i: (0, 0)),
            pl.BlockSpec((H, H2), lambda i: (0, 0)),
            pl.BlockSpec((8, VW), lambda i: (0, 0)),         # packed vectors
        ],
        out_specs=pl.BlockSpec((TB, K * H2), lambda i: (i, 0)),
        compiler_params=pltpu.CompilerParams(
            dimension_semantics=("parallel",)),
        cost_estimate=cost,
    )(traj_flat, diff2d, params['w1'], params['w2e'], params['w2d'],
      params['w3'], vec)

    # Lane-exact output: only a reshape, no slicing copy over a padded array.
    return out2d.reshape(Bp, K, H2)[:B]


def reference(traj_hist, diff, params):
    """Pure-JAX f32 mirror of the PyTorch forward (uses the explicit concat)."""
    B = traj_hist.shape[0]
    x = traj_hist.reshape(B, -1)
    emb = _leaky_relu(_layer_norm(x @ params['w1'] + params['b1'],
                                  params['g1'], params['be1']))           # (B, E)
    emb_rep = jnp.repeat(emb[:, None, :], diff.shape[1], axis=1)          # (B, K, E)
    xcat = jnp.concatenate([emb_rep, diff], axis=-1)                      # (B, K, E+2)
    w2 = jnp.concatenate([params['w2e'], params['w2d']], axis=0)          # (E+2, 64)
    h = _leaky_relu(_layer_norm(jnp.einsum('bki,io->bko', xcat, w2) + params['b2'],
                                params['g2'], params['be2']))             # (B, K, 64)
    return jnp.einsum('bkf,fo->bko', h, params['w3']) + params['b3']      # (B, K, H2)


def init_params(key, in_features, hist_len, emb_size=32, horizon=12):
    din = in_features * hist_len
    ks = jax.random.split(key, 8)
    f32 = jnp.float32
    return {
        # traj_encoder: leaky_MLP(din, emb_size)
        'w1':  0.1 * jax.random.normal(ks[0], (din, emb_size), f32),
        'b1':  0.1 * jax.random.normal(ks[1], (1, emb_size), f32),
        'g1':  jnp.ones((1, emb_size), f32) + 0.05 * jax.random.normal(ks[2], (1, emb_size), f32),
        'be1': jnp.zeros((1, emb_size), f32),
        # traj_decoder[0]: leaky_MLP(emb_size + 2, 64), weight split into emb/diff parts
        'w2e': 0.1 * jax.random.normal(ks[3], (emb_size, 64), f32),
        'w2d': 0.1 * jax.random.normal(ks[4], (2, 64), f32),
        'b2':  0.1 * jax.random.normal(ks[5], (1, 64), f32),
        'g2':  jnp.ones((1, 64), f32),
        'be2': jnp.zeros((1, 64), f32),
        # traj_decoder[1]: Linear(64, horizon * 2)
        'w3':  0.1 * jax.random.normal(ks[6], (64, horizon * 2), f32),
        'b3':  0.1 * jax.random.normal(ks[7], (1, horizon * 2), f32),
    }


if __name__ == "__main__":
    T, F = 8, 4                # trajectory_hist_length, in_features
    K = 6                      # number of diff/anchor candidates
    EMB, HORIZON = 32, 12

    key = jax.random.PRNGKey(0)
    kp, kt, kd, kt2, kd2 = jax.random.split(key, 5)
    params = init_params(kp, F, T, emb_size=EMB, horizon=HORIZON)

    # Tolerance covers the MXU matmul path (f32 operands, f32 accumulation;
    # contraction dims are tiny so error is normally far below this).
    TOL = 2e-2

    # Case 1: tiny batch (single grid step, block == full array).
    B = 2
    traj_hist = jax.random.normal(kt, (B, T, F), jnp.float32)
    diff = jax.random.normal(kd, (B, K, 2), jnp.float32)
    out = jax.block_until_ready(home_mlp_decoder(traj_hist, diff, params))
    ref = jax.block_until_ready(reference(traj_hist, diff, params))
    assert out.shape == (B, K, HORIZON * 2), out.shape
    assert jnp.allclose(out, ref, rtol=TOL, atol=TOL), \
        f"max abs err {jnp.max(jnp.abs(out - ref))}"

    # Case 2: batch that exercises tiling, padding and the multi-step grid.
    B2 = 20
    traj_hist2 = jax.random.normal(kt2, (B2, T, F), jnp.float32)
    diff2 = jax.random.normal(kd2, (B2, K, 2), jnp.float32)
    out2 = jax.block_until_ready(home_mlp_decoder(traj_hist2, diff2, params))
    ref2 = jax.block_until_ready(reference(traj_hist2, diff2, params))
    assert out2.shape == (B2, K, HORIZON * 2), out2.shape
    assert jnp.allclose(out2, ref2, rtol=TOL, atol=TOL), \
        f"max abs err {jnp.max(jnp.abs(out2 - ref2))}"

    print("KERNEL_OK")
</pallas_src>

<mosaic_0001>
module attributes {stable_mosaic.version = 11 : i64} {
  func.func @home_decoder_kernel(%arg0: i32, %arg1: memref<2x32xf32, #tpu.memory_space<vmem>>, %arg2: memref<2x12xf32, #tpu.memory_space<vmem>>, %arg3: memref<32x32xf32, #tpu.memory_space<vmem>>, %arg4: memref<32x64xf32, #tpu.memory_space<vmem>>, %arg5: memref<2x64xf32, #tpu.memory_space<vmem>>, %arg6: memref<64x24xf32, #tpu.memory_space<vmem>>, %arg7: memref<8x128xf32, #tpu.memory_space<vmem>>, %arg8: memref<2x144xf32, #tpu.memory_space<vmem>>) attributes {dimension_semantics = [#tpu.dimension_semantics<parallel>], iteration_bounds = array<i64: 1>, scalar_prefetch = 0 : i64, scratch_operands = 0 : i64, tpu.core_type = #tpu.core_type<tc>, window_params = [{transform_indices = @transform_0, window_bounds = array<i64: 2, 32>}, {transform_indices = @transform_1, window_bounds = array<i64: 2, 12>}, {pipeline_mode = #tpu.pipeline_mode<synchronous>, transform_indices = @transform_2, window_bounds = array<i64: 32, 32>}, {pipeline_mode = #tpu.pipeline_mode<synchronous>, transform_indices = @transform_3, window_bounds = array<i64: 32, 64>}, {pipeline_mode = #tpu.pipeline_mode<synchronous>, transform_indices = @transform_4, window_bounds = array<i64: 2, 64>}, {pipeline_mode = #tpu.pipeline_mode<synchronous>, transform_indices = @transform_5, window_bounds = array<i64: 64, 24>}, {pipeline_mode = #tpu.pipeline_mode<synchronous>, transform_indices = @transform_6, window_bounds = array<i64: 8, 128>}, {transform_indices = @transform_7, window_bounds = array<i64: 2, 144>}]} {
    %c0 = arith.constant 0 : index
    %c0_0 = arith.constant 0 : index
    %0 = vector.load %arg7[%c0, %c0_0] : memref<8x128xf32, #tpu.memory_space<vmem>>, vector<1x32xf32>
    %c1 = arith.constant 1 : index
    %c0_1 = arith.constant 0 : index
    %1 = vector.load %arg7[%c1, %c0_1] : memref<8x128xf32, #tpu.memory_space<vmem>>, vector<1x32xf32>
    %c2 = arith.constant 2 : index
    %c0_2 = arith.constant 0 : index
    %2 = vector.load %arg7[%c2, %c0_2] : memref<8x128xf32, #tpu.memory_space<vmem>>, vector<1x32xf32>
    %c3 = arith.constant 3 : index
    %c0_3 = arith.constant 0 : index
    %3 = vector.load %arg7[%c3, %c0_3] : memref<8x128xf32, #tpu.memory_space<vmem>>, vector<1x64xf32>
    %c4 = arith.constant 4 : index
    %c0_4 = arith.constant 0 : index
    %4 = vector.load %arg7[%c4, %c0_4] : memref<8x128xf32, #tpu.memory_space<vmem>>, vector<1x64xf32>
    %c5 = arith.constant 5 : index
    %c0_5 = arith.constant 0 : index
    %5 = vector.load %arg7[%c5, %c0_5] : memref<8x128xf32, #tpu.memory_space<vmem>>, vector<1x64xf32>
    %c6 = arith.constant 6 : index
    %c0_6 = arith.constant 0 : index
    %6 = vector.load %arg7[%c6, %c0_6] : memref<8x128xf32, #tpu.memory_space<vmem>>, vector<1x24xf32>
    %c0_7 = arith.constant 0 : index
    %c0_8 = arith.constant 0 : index
    %7 = vector.load %arg1[%c0_7, %c0_8] : memref<2x32xf32, #tpu.memory_space<vmem>>, vector<2x32xf32>
    %c0_9 = arith.constant 0 : index
    %c0_10 = arith.constant 0 : index
    %8 = vector.load %arg3[%c0_9, %c0_10] : memref<32x32xf32, #tpu.memory_space<vmem>>, vector<32x32xf32>
    %cst = arith.constant dense<0.000000e+00> : vector<2x32xf32>
    %9 = tpu.matmul %7, %8, %cst {dimension_numbers = #tpu.dot_dimension_numbers<[1], [0], [0], [1], [0, 0, 1, 1], [], []>} : vector<2x32xf32>, vector<32x32xf32>, vector<2x32xf32> -> vector<2x32xf32>
    %10 = vector.broadcast %0 : vector<1x32xf32> to vector<2x32xf32>
    %11 = arith.addf %9, %10 : vector<2x32xf32>
    %cst_11 = arith.constant dense<0.000000e+00> : vector<2xf32>
    %12 = vector.multi_reduction <add>, %11, %cst_11 [1] : vector<2x32xf32> to vector<2xf32>
    %13 = vector.shape_cast %12 : vector<2xf32> to vector<2x1xf32>
    %cst_12 = arith.constant 3.200000e+01 : f32
    %14 = vector.broadcast %cst_12 : f32 to vector<2x1xf32>
    %15 = arith.divf %13, %14 : vector<2x1xf32>
    %16 = vector.broadcast %15 : vector<2x1xf32> to vector<2x32xf32>
    %17 = arith.subf %11, %16 : vector<2x32xf32>
    %18 = arith.mulf %17, %17 : vector<2x32xf32>
    %cst_13 = arith.constant dense<0.000000e+00> : vector<2xf32>
    %19 = vector.multi_reduction <add>, %18, %cst_13 [1] : vector<2x32xf32> to vector<2xf32>
    %20 = vector.shape_cast %19 : vector<2xf32> to vector<2x1xf32>
    %cst_14 = arith.constant 3.200000e+01 : f32
    %21 = vector.broadcast %cst_14 : f32 to vector<2x1xf32>
    %22 = arith.divf %20, %21 : vector<2x1xf32>
    %cst_15 = arith.constant 9.99999974E-6 : f32
    %23 = vector.broadcast %cst_15 : f32 to vector<2x1xf32>
    %24 = arith.addf %22, %23 : vector<2x1xf32>
    %25 = math.rsqrt %24 : vector<2x1xf32>
    %26 = vector.broadcast %15 : vector<2x1xf32> to vector<2x32xf32>
    %27 = arith.subf %11, %26 : vector<2x32xf32>
    %28 = vector.broadcast %25 : vector<2x1xf32> to vector<2x32xf32>
    %29 = arith.mulf %27, %28 : vector<2x32xf32>
    %30 = vector.broadcast %1 : vector<1x32xf32> to vector<2x32xf32>
    %31 = arith.mulf %29, %30 : vector<2x32xf32>
    %32 = vector.broadcast %2 : vector<1x32xf32> to vector<2x32xf32>
    %33 = arith.addf %31, %32 : vector<2x32xf32>
    %cst_16 = arith.constant 0.000000e+00 : f32
    %34 = vector.broadcast %cst_16 : f32 to vector<2x32xf32>
    %35 = arith.cmpf ogt, %33, %34 : vector<2x32xf32>
    %cst_17 = arith.constant 0.00999999977 : f32
    %36 = vector.broadcast %cst_17 : f32 to vector<2x32xf32>
    %37 = arith.mulf %36, %33 : vector<2x32xf32>
    %38 = arith.select %35, %33, %37 : vector<2x32xi1>, vector<2x32xf32>
    %c0_18 = arith.constant 0 : index
    %c0_19 = arith.constant 0 : index
    %39 = vector.load %arg4[%c0_18, %c0_19] : memref<32x64xf32, #tpu.memory_space<vmem>>, vector<32x64xf32>
    %cst_20 = arith.constant dense<0.000000e+00> : vector<2x64xf32>
    %40 = tpu.matmul %38, %39, %cst_20 {dimension_numbers = #tpu.dot_dimension_numbers<[1], [0], [0], [1], [0, 0, 1, 1], [], []>} : vector<2x32xf32>, vector<32x64xf32>, vector<2x64xf32> -> vector<2x64xf32>
    %41 = vector.broadcast %3 : vector<1x64xf32> to vector<2x64xf32>
    %42 = arith.addf %40, %41 : vector<2x64xf32>
    %c0_21 = arith.constant 0 : index
    %c0_22 = arith.constant 0 : index
    %43 = vector.load %arg5[%c0_21, %c0_22] : memref<2x64xf32, #tpu.memory_space<vmem>>, vector<2x64xf32>
    %c0_23 = arith.constant 0 : index
    %c0_24 = arith.constant 0 : index
    %44 = vector.load %arg6[%c0_23, %c0_24] : memref<64x24xf32, #tpu.memory_space<vmem>>, vector<64x24xf32>
    %c0_25 = arith.constant 0 : index
    %c0_26 = arith.constant 0 : index
    %45 = vector.load %arg2[%c0_25, %c0_26] : memref<2x12xf32, #tpu.memory_space<vmem>>, vector<2x12xf32>
    %46 = vector.extract_strided_slice %45 {offsets = [0, 0], sizes = [2, 6], strides = [1, 1]} : vector<2x12xf32> to vector<2x6xf32>
    %47 = vector.extract_strided_slice %45 {offsets = [0, 6], sizes = [2, 6], strides = [1, 1]} : vector<2x12xf32> to vector<2x6xf32>
    %48 = vector.extract_strided_slice %46 {offsets = [0, 0], sizes = [2, 1], strides = [1, 1]} : vector<2x6xf32> to vector<2x1xf32>
    %49 = vector.extract_strided_slice %43 {offsets = [0, 0], sizes = [1, 64], strides = [1, 1]} : vector<2x64xf32> to vector<1x64xf32>
    %50 = vector.broadcast %48 : vector<2x1xf32> to vector<2x64xf32>
    %51 = vector.broadcast %49 : vector<1x64xf32> to vector<2x64xf32>
    %52 = arith.mulf %50, %51 : vector<2x64xf32>
    %53 = arith.addf %42, %52 : vector<2x64xf32>
    %54 = vector.extract_strided_slice %47 {offsets = [0, 0], sizes = [2, 1], strides = [1, 1]} : vector<2x6xf32> to vector<2x1xf32>
    %55 = vector.extract_strided_slice %43 {offsets = [1, 0], sizes = [1, 64], strides = [1, 1]} : vector<2x64xf32> to vector<1x64xf32>
    %56 = vector.broadcast %54 : vector<2x1xf32> to vector<2x64xf32>
    %57 = vector.broadcast %55 : vector<1x64xf32> to vector<2x64xf32>
    %58 = arith.mulf %56, %57 : vector<2x64xf32>
    %59 = arith.addf %53, %58 : vector<2x64xf32>
    %cst_27 = arith.constant dense<0.000000e+00> : vector<2xf32>
    %60 = vector.multi_reduction <add>, %59, %cst_27 [1] : vector<2x64xf32> to vector<2xf32>
    %61 = vector.shape_cast %60 : vector<2xf32> to vector<2x1xf32>
    %cst_28 = arith.constant 6.400000e+01 : f32
    %62 = vector.broadcast %cst_28 : f32 to vector<2x1xf32>
    %63 = arith.divf %61, %62 : vector<2x1xf32>
    %64 = vector.broadcast %63 : vector<2x1xf32> to vector<2x64xf32>
    %65 = arith.subf %59, %64 : vector<2x64xf32>
    %66 = arith.mulf %65, %65 : vector<2x64xf32>
    %cst_29 = arith.constant dense<0.000000e+00> : vector<2xf32>
    %67 = vector.multi_reduction <add>, %66, %cst_29 [1] : vector<2x64xf32> to vector<2xf32>
    %68 = vector.shape_cast %67 : vector<2xf32> to vector<2x1xf32>
    %cst_30 = arith.constant 6.400000e+01 : f32
    %69 = vector.broadcast %cst_30 : f32 to vector<2x1xf32>
    %70 = arith.divf %68, %69 : vector<2x1xf32>
    %cst_31 = arith.constant 9.99999974E-6 : f32
    %71 = vector.broadcast %cst_31 : f32 to vector<2x1xf32>
    %72 = arith.addf %70, %71 : vector<2x1xf32>
    %73 = math.rsqrt %72 : vector<2x1xf32>
    %74 = vector.broadcast %63 : vector<2x1xf32> to vector<2x64xf32>
    %75 = arith.subf %59, %74 : vector<2x64xf32>
    %76 = vector.broadcast %73 : vector<2x1xf32> to vector<2x64xf32>
    %77 = arith.mulf %75, %76 : vector<2x64xf32>
    %78 = vector.broadcast %4 : vector<1x64xf32> to vector<2x64xf32>
    %79 = arith.mulf %77, %78 : vector<2x64xf32>
    %80 = vector.broadcast %5 : vector<1x64xf32> to vector<2x64xf32>
    %81 = arith.addf %79, %80 : vector<2x64xf32>
    %cst_32 = arith.constant 0.000000e+00 : f32
    %82 = vector.broadcast %cst_32 : f32 to vector<2x64xf32>
    %83 = arith.cmpf ogt, %81, %82 : vector<2x64xf32>
    %cst_33 = arith.constant 0.00999999977 : f32
    %84 = vector.broadcast %cst_33 : f32 to vector<2x64xf32>
    %85 = arith.mulf %84, %81 : vector<2x64xf32>
    %86 = arith.select %83, %81, %85 : vector<2x64xi1>, vector<2x64xf32>
    %cst_34 = arith.constant dense<0.000000e+00> : vector<2x24xf32>
    %87 = tpu.matmul %86, %44, %cst_34 {dimension_numbers = #tpu.dot_dimension_numbers<[1], [0], [0], [1], [0, 0, 1, 1], [], []>} : vector<2x64xf32>, vector<64x24xf32>, vector<2x24xf32> -> vector<2x24xf32>
    %88 = vector.broadcast %6 : vector<1x24xf32> to vector<2x24xf32>
    %89 = arith.addf %87, %88 : vector<2x24xf32>
    %c0_35 = arith.constant 0 : index
    %c0_36 = arith.constant 0 : index
    %90 = vector.load %arg8[%c0_35, %c0_36] : memref<2x144xf32, #tpu.memory_space<vmem>>, vector<2x24xf32>
    tpu.vector_store %arg8[%c0_35, %c0_36], %89 {strides = array<i32>} : memref<2x144xf32, #tpu.memory_space<vmem>>, vector<2x24xf32>,
    %91 = vector.extract_strided_slice %46 {offsets = [0, 1], sizes = [2, 1], strides = [1, 1]} : vector<2x6xf32> to vector<2x1xf32>
    %92 = vector.extract_strided_slice %43 {offsets = [0, 0], sizes = [1, 64], strides = [1, 1]} : vector<2x64xf32> to vector<1x64xf32>
    %93 = vector.broadcast %91 : vector<2x1xf32> to vector<2x64xf32>
    %94 = vector.broadcast %92 : vector<1x64xf32> to vector<2x64xf32>
    %95 = arith.mulf %93, %94 : vector<2x64xf32>
    %96 = arith.addf %42, %95 : vector<2x64xf32>
    %97 = vector.extract_strided_slice %47 {offsets = [0, 1], sizes = [2, 1], strides = [1, 1]} : vector<2x6xf32> to vector<2x1xf32>
    %98 = vector.extract_strided_slice %43 {offsets = [1, 0], sizes = [1, 64], strides = [1, 1]} : vector<2x64xf32> to vector<1x64xf32>
    %99 = vector.broadcast %97 : vector<2x1xf32> to vector<2x64xf32>
    %100 = vector.broadcast %98 : vector<1x64xf32> to vector<2x64xf32>
    %101 = arith.mulf %99, %100 : vector<2x64xf32>
    %102 = arith.addf %96, %101 : vector<2x64xf32>
    %cst_37 = arith.constant dense<0.000000e+00> : vector<2xf32>
    %103 = vector.multi_reduction <add>, %102, %cst_37 [1] : vector<2x64xf32> to vector<2xf32>
    %104 = vector.shape_cast %103 : vector<2xf32> to vector<2x1xf32>
    %cst_38 = arith.constant 6.400000e+01 : f32
    %105 = vector.broadcast %cst_38 : f32 to vector<2x1xf32>
    %106 = arith.divf %104, %105 : vector<2x1xf32>
    %107 = vector.broadcast %106 : vector<2x1xf32> to vector<2x64xf32>
    %108 = arith.subf %102, %107 : vector<2x64xf32>
    %109 = arith.mulf %108, %108 : vector<2x64xf32>
    %cst_39 = arith.constant dense<0.000000e+00> : vector<2xf32>
    %110 = vector.multi_reduction <add>, %109, %cst_39 [1] : vector<2x64xf32> to vector<2xf32>
    %111 = vector.shape_cast %110 : vector<2xf32> to vector<2x1xf32>
    %cst_40 = arith.constant 6.400000e+01 : f32
    %112 = vector.broadcast %cst_40 : f32 to vector<2x1xf32>
    %113 = arith.divf %111, %112 : vector<2x1xf32>
    %cst_41 = arith.constant 9.99999974E-6 : f32
    %114 = vector.broadcast %cst_41 : f32 to vector<2x1xf32>
    %115 = arith.addf %113, %114 : vector<2x1xf32>
    %116 = math.rsqrt %115 : vector<2x1xf32>
    %117 = vector.broadcast %106 : vector<2x1xf32> to vector<2x64xf32>
    %118 = arith.subf %102, %117 : vector<2x64xf32>
    %119 = vector.broadcast %116 : vector<2x1xf32> to vector<2x64xf32>
    %120 = arith.mulf %118, %119 : vector<2x64xf32>
    %121 = vector.broadcast %4 : vector<1x64xf32> to vector<2x64xf32>
    %122 = arith.mulf %120, %121 : vector<2x64xf32>
    %123 = vector.broadcast %5 : vector<1x64xf32> to vector<2x64xf32>
    %124 = arith.addf %122, %123 : vector<2x64xf32>
    %cst_42 = arith.constant 0.000000e+00 : f32
    %125 = vector.broadcast %cst_42 : f32 to vector<2x64xf32>
    %126 = arith.cmpf ogt, %124, %125 : vector<2x64xf32>
    %cst_43 = arith.constant 0.00999999977 : f32
    %127 = vector.broadcast %cst_43 : f32 to vector<2x64xf32>
    %128 = arith.mulf %127, %124 : vector<2x64xf32>
    %129 = arith.select %126, %124, %128 : vector<2x64xi1>, vector<2x64xf32>
    %cst_44 = arith.constant dense<0.000000e+00> : vector<2x24xf32>
    %130 = tpu.matmul %129, %44, %cst_44 {dimension_numbers = #tpu.dot_dimension_numbers<[1], [0], [0], [1], [0, 0, 1, 1], [], []>} : vector<2x64xf32>, vector<64x24xf32>, vector<2x24xf32> -> vector<2x24xf32>
    %131 = vector.broadcast %6 : vector<1x24xf32> to vector<2x24xf32>
    %132 = arith.addf %130, %131 : vector<2x24xf32>
    %c0_45 = arith.constant 0 : index
    %c24 = arith.constant 24 : index
    %133 = vector.load %arg8[%c0_45, %c24] : memref<2x144xf32, #tpu.memory_space<vmem>>, vector<2x24xf32>
    tpu.vector_store %arg8[%c0_45, %c24], %132 {strides = array<i32>} : memref<2x144xf32, #tpu.memory_space<vmem>>, vector<2x24xf32>,
    %134 = vector.extract_strided_slice %46 {offsets = [0, 2], sizes = [2, 1], strides = [1, 1]} : vector<2x6xf32> to vector<2x1xf32>
    %135 = vector.extract_strided_slice %43 {offsets = [0, 0], sizes = [1, 64], strides = [1, 1]} : vector<2x64xf32> to vector<1x64xf32>
    %136 = vector.broadcast %134 : vector<2x1xf32> to vector<2x64xf32>
    %137 = vector.broadcast %135 : vector<1x64xf32> to vector<2x64xf32>
    %138 = arith.mulf %136, %137 : vector<2x64xf32>
    %139 = arith.addf %42, %138 : vector<2x64xf32>
    %140 = vector.extract_strided_slice %47 {offsets = [0, 2], sizes = [2, 1], strides = [1, 1]} : vector<2x6xf32> to vector<2x1xf32>
    %141 = vector.extract_strided_slice %43 {offsets = [1, 0], sizes = [1, 64], strides = [1, 1]} : vector<2x64xf32> to vector<1x64xf32>
    %142 = vector.broadcast %140 : vector<2x1xf32> to vector<2x64xf32>
    %143 = vector.broadcast %141 : vector<1x64xf32> to vector<2x64xf32>
    %144 = arith.mulf %142, %143 : vector<2x64xf32>
    %145 = arith.addf %139, %144 : vector<2x64xf32>
    %cst_46 = arith.constant dense<0.000000e+00> : vector<2xf32>
    %146 = vector.multi_reduction <add>, %145, %cst_46 [1] : vector<2x64xf32> to vector<2xf32>
    %147 = vector.shape_cast %146 : vector<2xf32> to vector<2x1xf32>
    %cst_47 = arith.constant 6.400000e+01 : f32
    %148 = vector.broadcast %cst_47 : f32 to vector<2x1xf32>
    %149 = arith.divf %147, %148 : vector<2x1xf32>
    %150 = vector.broadcast %149 : vector<2x1xf32> to vector<2x64xf32>
    %151 = arith.subf %145, %150 : vector<2x64xf32>
    %152 = arith.mulf %151, %151 : vector<2x64xf32>
    %cst_48 = arith.constant dense<0.000000e+00> : vector<2xf32>
    %153 = vector.multi_reduction <add>, %152, %cst_48 [1] : vector<2x64xf32> to vector<2xf32>
    %154 = vector.shape_cast %153 : vector<2xf32> to vector<2x1xf32>
    %cst_49 = arith.constant 6.400000e+01 : f32
    %155 = vector.broadcast %cst_49 : f32 to vector<2x1xf32>
    %156 = arith.divf %154, %155 : vector<2x1xf32>
    %cst_50 = arith.constant 9.99999974E-6 : f32
    %157 = vector.broadcast %cst_50 : f32 to vector<2x1xf32>
    %158 = arith.addf %156, %157 : vector<2x1xf32>
    %159 = math.rsqrt %158 : vector<2x1xf32>
    %160 = vector.broadcast %149 : vector<2x1xf32> to vector<2x64xf32>
    %161 = arith.subf %145, %160 : vector<2x64xf32>
    %162 = vector.broadcast %159 : vector<2x1xf32> to vector<2x64xf32>
    %163 = arith.mulf %161, %162 : vector<2x64xf32>
    %164 = vector.broadcast %4 : vector<1x64xf32> to vector<2x64xf32>
    %165 = arith.mulf %163, %164 : vector<2x64xf32>
    %166 = vector.broadcast %5 : vector<1x64xf32> to vector<2x64xf32>
    %167 = arith.addf %165, %166 : vector<2x64xf32>
    %cst_51 = arith.constant 0.000000e+00 : f32
    %168 = vector.broadcast %cst_51 : f32 to vector<2x64xf32>
    %169 = arith.cmpf ogt, %167, %168 : vector<2x64xf32>
    %cst_52 = arith.constant 0.00999999977 : f32
    %170 = vector.broadcast %cst_52 : f32 to vector<2x64xf32>
    %171 = arith.mulf %170, %167 : vector<2x64xf32>
    %172 = arith.select %169, %167, %171 : vector<2x64xi1>, vector<2x64xf32>
    %cst_53 = arith.constant dense<0.000000e+00> : vector<2x24xf32>
    %173 = tpu.matmul %172, %44, %cst_53 {dimension_numbers = #tpu.dot_dimension_numbers<[1], [0], [0], [1], [0, 0, 1, 1], [], []>} : vector<2x64xf32>, vector<64x24xf32>, vector<2x24xf32> -> vector<2x24xf32>
    %174 = vector.broadcast %6 : vector<1x24xf32> to vector<2x24xf32>
    %175 = arith.addf %173, %174 : vector<2x24xf32>
    %c0_54 = arith.constant 0 : index
    %c48 = arith.constant 48 : index
    %176 = vector.load %arg8[%c0_54, %c48] : memref<2x144xf32, #tpu.memory_space<vmem>>, vector<2x24xf32>
    tpu.vector_store %arg8[%c0_54, %c48], %175 {strides = array<i32>} : memref<2x144xf32, #tpu.memory_space<vmem>>, vector<2x24xf32>,
    %177 = vector.extract_strided_slice %46 {offsets = [0, 3], sizes = [2, 1], strides = [1, 1]} : vector<2x6xf32> to vector<2x1xf32>
    %178 = vector.extract_strided_slice %43 {offsets = [0, 0], sizes = [1, 64], strides = [1, 1]} : vector<2x64xf32> to vector<1x64xf32>
    %179 = vector.broadcast %177 : vector<2x1xf32> to vector<2x64xf32>
    %180 = vector.broadcast %178 : vector<1x64xf32> to vector<2x64xf32>
    %181 = arith.mulf %179, %180 : vector<2x64xf32>
    %182 = arith.addf %42, %181 : vector<2x64xf32>
    %183 = vector.extract_strided_slice %47 {offsets = [0, 3], sizes = [2, 1], strides = [1, 1]} : vector<2x6xf32> to vector<2x1xf32>
    %184 = vector.extract_strided_slice %43 {offsets = [1, 0], sizes = [1, 64], strides = [1, 1]} : vector<2x64xf32> to vector<1x64xf32>
    %185 = vector.broadcast %183 : vector<2x1xf32> to vector<2x64xf32>
    %186 = vector.broadcast %184 : vector<1x64xf32> to vector<2x64xf32>
    %187 = arith.mulf %185, %186 : vector<2x64xf32>
    %188 = arith.addf %182, %187 : vector<2x64xf32>
    %cst_55 = arith.constant dense<0.000000e+00> : vector<2xf32>
    %189 = vector.multi_reduction <add>, %188, %cst_55 [1] : vector<2x64xf32> to vector<2xf32>
    %190 = vector.shape_cast %189 : vector<2xf32> to vector<2x1xf32>
    %cst_56 = arith.constant 6.400000e+01 : f32
    %191 = vector.broadcast %cst_56 : f32 to vector<2x1xf32>
    %192 = arith.divf %190, %191 : vector<2x1xf32>
    %193 = vector.broadcast %192 : vector<2x1xf32> to vector<2x64xf32>
    %194 = arith.subf %188, %193 : vector<2x64xf32>
    %195 = arith.mulf %194, %194 : vector<2x64xf32>
    %cst_57 = arith.constant dense<0.000000e+00> : vector<2xf32>
    %196 = vector.multi_reduction <add>, %195, %cst_57 [1] : vector<2x64xf32> to vector<2xf32>
    %197 = vector.shape_cast %196 : vector<2xf32> to vector<2x1xf32>
    %cst_58 = arith.constant 6.400000e+01 : f32
    %198 = vector.broadcast %cst_58 : f32 to vector<2x1xf32>
    %199 = arith.divf %197, %198 : vector<2x1xf32>
    %cst_59 = arith.constant 9.99999974E-6 : f32
    %200 = vector.broadcast %cst_59 : f32 to vector<2x1xf32>
    %201 = arith.addf %199, %200 : vector<2x1xf32>
    %202 = math.rsqrt %201 : vector<2x1xf32>
    %203 = vector.broadcast %192 : vector<2x1xf32> to vector<2x64xf32>
    %204 = arith.subf %188, %203 : vector<2x64xf32>
    %205 = vector.broadcast %202 : vector<2x1xf32> to vector<2x64xf32>
    %206 = arith.mulf %204, %205 : vector<2x64xf32>
    %207 = vector.broadcast %4 : vector<1x64xf32> to vector<2x64xf32>
    %208 = arith.mulf %206, %207 : vector<2x64xf32>
    %209 = vector.broadcast %5 : vector<1x64xf32> to vector<2x64xf32>
    %210 = arith.addf %208, %209 : vector<2x64xf32>
    %cst_60 = arith.constant 0.000000e+00 : f32
    %211 = vector.broadcast %cst_60 : f32 to vector<2x64xf32>
    %212 = arith.cmpf ogt, %210, %211 : vector<2x64xf32>
    %cst_61 = arith.constant 0.00999999977 : f32
    %213 = vector.broadcast %cst_61 : f32 to vector<2x64xf32>
    %214 = arith.mulf %213, %210 : vector<2x64xf32>
    %215 = arith.select %212, %210, %214 : vector<2x64xi1>, vector<2x64xf32>
    %cst_62 = arith.constant dense<0.000000e+00> : vector<2x24xf32>
    %216 = tpu.matmul %215, %44, %cst_62 {dimension_numbers = #tpu.dot_dimension_numbers<[1], [0], [0], [1], [0, 0, 1, 1], [], []>} : vector<2x64xf32>, vector<64x24xf32>, vector<2x24xf32> -> vector<2x24xf32>
    %217 = vector.broadcast %6 : vector<1x24xf32> to vector<2x24xf32>
    %218 = arith.addf %216, %217 : vector<2x24xf32>
    %c0_63 = arith.constant 0 : index
    %c72 = arith.constant 72 : index
    %219 = vector.load %arg8[%c0_63, %c72] : memref<2x144xf32, #tpu.memory_space<vmem>>, vector<2x24xf32>
    tpu.vector_store %arg8[%c0_63, %c72], %218 {strides = array<i32>} : memref<2x144xf32, #tpu.memory_space<vmem>>, vector<2x24xf32>,
    %220 = vector.extract_strided_slice %46 {offsets = [0, 4], sizes = [2, 1], strides = [1, 1]} : vector<2x6xf32> to vector<2x1xf32>
    %221 = vector.extract_strided_slice %43 {offsets = [0, 0], sizes = [1, 64], strides = [1, 1]} : vector<2x64xf32> to vector<1x64xf32>
    %222 = vector.broadcast %220 : vector<2x1xf32> to vector<2x64xf32>
    %223 = vector.broadcast %221 : vector<1x64xf32> to vector<2x64xf32>
    %224 = arith.mulf %222, %223 : vector<2x64xf32>
    %225 = arith.addf %42, %224 : vector<2x64xf32>
    %226 = vector.extract_strided_slice %47 {offsets = [0, 4], sizes = [2, 1], strides = [1, 1]} : vector<2x6xf32> to vector<2x1xf32>
    %227 = vector.extract_strided_slice %43 {offsets = [1, 0], sizes = [1, 64], strides = [1, 1]} : vector<2x64xf32> to vector<1x64xf32>
    %228 = vector.broadcast %226 : vector<2x1xf32> to vector<2x64xf32>
    %229 = vector.broadcast %227 : vector<1x64xf32> to vector<2x64xf32>
    %230 = arith.mulf %228, %229 : vector<2x64xf32>
    %231 = arith.addf %225, %230 : vector<2x64xf32>
    %cst_64 = arith.constant dense<0.000000e+00> : vector<2xf32>
    %232 = vector.multi_reduction <add>, %231, %cst_64 [1] : vector<2x64xf32> to vector<2xf32>
    %233 = vector.shape_cast %232 : vector<2xf32> to vector<2x1xf32>
    %cst_65 = arith.constant 6.400000e+01 : f32
    %234 = vector.broadcast %cst_65 : f32 to vector<2x1xf32>
    %235 = arith.divf %233, %234 : vector<2x1xf32>
    %236 = vector.broadcast %235 : vector<2x1xf32> to vector<2x64xf32>
    %237 = arith.subf %231, %236 : vector<2x64xf32>
    %238 = arith.mulf %237, %237 : vector<2x64xf32>
    %cst_66 = arith.constant dense<0.000000e+00> : vector<2xf32>
    %239 = vector.multi_reduction <add>, %238, %cst_66 [1] : vector<2x64xf32> to vector<2xf32>
    %240 = vector.shape_cast %239 : vector<2xf32> to vector<2x1xf32>
    %cst_67 = arith.constant 6.400000e+01 : f32
    %241 = vector.broadcast %cst_67 : f32 to vector<2x1xf32>
    %242 = arith.divf %240, %241 : vector<2x1xf32>
    %cst_68 = arith.constant 9.99999974E-6 : f32
    %243 = vector.broadcast %cst_68 : f32 to vector<2x1xf32>
    %244 = arith.addf %242, %243 : vector<2x1xf32>
    %245 = math.rsqrt %244 : vector<2x1xf32>
    %246 = vector.broadcast %235 : vector<2x1xf32> to vector<2x64xf32>
    %247 = arith.subf %231, %246 : vector<2x64xf32>
    %248 = vector.broadcast %245 : vector<2x1xf32> to vector<2x64xf32>
    %249 = arith.mulf %247, %248 : vector<2x64xf32>
    %250 = vector.broadcast %4 : vector<1x64xf32> to vector<2x64xf32>
    %251 = arith.mulf %249, %250 : vector<2x64xf32>
    %252 = vector.broadcast %5 : vector<1x64xf32> to vector<2x64xf32>
    %253 = arith.addf %251, %252 : vector<2x64xf32>
    %cst_69 = arith.constant 0.000000e+00 : f32
    %254 = vector.broadcast %cst_69 : f32 to vector<2x64xf32>
    %255 = arith.cmpf ogt, %253, %254 : vector<2x64xf32>
    %cst_70 = arith.constant 0.00999999977 : f32
    %256 = vector.broadcast %cst_70 : f32 to vector<2x64xf32>
    %257 = arith.mulf %256, %253 : vector<2x64xf32>
    %258 = arith.select %255, %253, %257 : vector<2x64xi1>, vector<2x64xf32>
    %cst_71 = arith.constant dense<0.000000e+00> : vector<2x24xf32>
    %259 = tpu.matmul %258, %44, %cst_71 {dimension_numbers = #tpu.dot_dimension_numbers<[1], [0], [0], [1], [0, 0, 1, 1], [], []>} : vector<2x64xf32>, vector<64x24xf32>, vector<2x24xf32> -> vector<2x24xf32>
    %260 = vector.broadcast %6 : vector<1x24xf32> to vector<2x24xf32>
    %261 = arith.addf %259, %260 : vector<2x24xf32>
    %c0_72 = arith.constant 0 : index
    %c96 = arith.constant 96 : index
    %262 = vector.load %arg8[%c0_72, %c96] : memref<2x144xf32, #tpu.memory_space<vmem>>, vector<2x24xf32>
    tpu.vector_store %arg8[%c0_72, %c96], %261 {strides = array<i32>} : memref<2x144xf32, #tpu.memory_space<vmem>>, vector<2x24xf32>,
    %263 = vector.extract_strided_slice %46 {offsets = [0, 5], sizes = [2, 1], strides = [1, 1]} : vector<2x6xf32> to vector<2x1xf32>
    %264 = vector.extract_strided_slice %43 {offsets = [0, 0], sizes = [1, 64], strides = [1, 1]} : vector<2x64xf32> to vector<1x64xf32>
    %265 = vector.broadcast %263 : vector<2x1xf32> to vector<2x64xf32>
    %266 = vector.broadcast %264 : vector<1x64xf32> to vector<2x64xf32>
    %267 = arith.mulf %265, %266 : vector<2x64xf32>
    %268 = arith.addf %42, %267 : vector<2x64xf32>
    %269 = vector.extract_strided_slice %47 {offsets = [0, 5], sizes = [2, 1], strides = [1, 1]} : vector<2x6xf32> to vector<2x1xf32>
    %270 = vector.extract_strided_slice %43 {offsets = [1, 0], sizes = [1, 64], strides = [1, 1]} : vector<2x64xf32> to vector<1x64xf32>
    %271 = vector.broadcast %269 : vector<2x1xf32> to vector<2x64xf32>
    %272 = vector.broadcast %270 : vector<1x64xf32> to vector<2x64xf32>
    %273 = arith.mulf %271, %272 : vector<2x64xf32>
    %274 = arith.addf %268, %273 : vector<2x64xf32>
    %cst_73 = arith.constant dense<0.000000e+00> : vector<2xf32>
    %275 = vector.multi_reduction <add>, %274, %cst_73 [1] : vector<2x64xf32> to vector<2xf32>
    %276 = vector.shape_cast %275 : vector<2xf32> to vector<2x1xf32>
    %cst_74 = arith.constant 6.400000e+01 : f32
    %277 = vector.broadcast %cst_74 : f32 to vector<2x1xf32>
    %278 = arith.divf %276, %277 : vector<2x1xf32>
    %279 = vector.broadcast %278 : vector<2x1xf32> to vector<2x64xf32>
    %280 = arith.subf %274, %279 : vector<2x64xf32>
    %281 = arith.mulf %280, %280 : vector<2x64xf32>
    %cst_75 = arith.constant dense<0.000000e+00> : vector<2xf32>
    %282 = vector.multi_reduction <add>, %281, %cst_75 [1] : vector<2x64xf32> to vector<2xf32>
    %283 = vector.shape_cast %282 : vector<2xf32> to vector<2x1xf32>
    %cst_76 = arith.constant 6.400000e+01 : f32
    %284 = vector.broadcast %cst_76 : f32 to vector<2x1xf32>
    %285 = arith.divf %283, %284 : vector<2x1xf32>
    %cst_77 = arith.constant 9.99999974E-6 : f32
    %286 = vector.broadcast %cst_77 : f32 to vector<2x1xf32>
    %287 = arith.addf %285, %286 : vector<2x1xf32>
    %288 = math.rsqrt %287 : vector<2x1xf32>
    %289 = vector.broadcast %278 : vector<2x1xf32> to vector<2x64xf32>
    %290 = arith.subf %274, %289 : vector<2x64xf32>
    %291 = vector.broadcast %288 : vector<2x1xf32> to vector<2x64xf32>
    %292 = arith.mulf %290, %291 : vector<2x64xf32>
    %293 = vector.broadcast %4 : vector<1x64xf32> to vector<2x64xf32>
    %294 = arith.mulf %292, %293 : vector<2x64xf32>
    %295 = vector.broadcast %5 : vector<1x64xf32> to vector<2x64xf32>
    %296 = arith.addf %294, %295 : vector<2x64xf32>
    %cst_78 = arith.constant 0.000000e+00 : f32
    %297 = vector.broadcast %cst_78 : f32 to vector<2x64xf32>
    %298 = arith.cmpf ogt, %296, %297 : vector<2x64xf32>
    %cst_79 = arith.constant 0.00999999977 : f32
    %299 = vector.broadcast %cst_79 : f32 to vector<2x64xf32>
    %300 = arith.mulf %299, %296 : vector<2x64xf32>
    %301 = arith.select %298, %296, %300 : vector<2x64xi1>, vector<2x64xf32>
    %cst_80 = arith.constant dense<0.000000e+00> : vector<2x24xf32>
    %302 = tpu.matmul %301, %44, %cst_80 {dimension_numbers = #tpu.dot_dimension_numbers<[1], [0], [0], [1], [0, 0, 1, 1], [], []>} : vector<2x64xf32>, vector<64x24xf32>, vector<2x24xf32> -> vector<2x24xf32>
    %303 = vector.broadcast %6 : vector<1x24xf32> to vector<2x24xf32>
    %304 = arith.addf %302, %303 : vector<2x24xf32>
    %c0_81 = arith.constant 0 : index
    %c120 = arith.constant 120 : index
    %305 = vector.load %arg8[%c0_81, %c120] : memref<2x144xf32, #tpu.memory_space<vmem>>, vector<2x24xf32>
    tpu.vector_store %arg8[%c0_81, %c120], %304 {strides = array<i32>} : memref<2x144xf32, #tpu.memory_space<vmem>>, vector<2x24xf32>,
    return
  }
  func.func @transform_0(%arg0: i32) -> (i32, i32) {
    %c0_i32 = arith.constant 0 : i32
    %c0_i32_0 = arith.constant 0 : i32
    return %arg0, %c0_i32 : i32, i32
  }
  func.func @transform_1(%arg0: i32) -> (i32, i32) {
    %c0_i32 = arith.constant 0 : i32
    %c0_i32_0 = arith.constant 0 : i32
    return %arg0, %c0_i32 : i32, i32
  }
  func.func @transform_2(%arg0: i32) -> (i32, i32) {
    %c0_i32 = arith.constant 0 : i32
    %c0_i32_0 = arith.constant 0 : i32
    %c0_i32_1 = arith.constant 0 : i32
    return %c0_i32, %c0_i32_0 : i32, i32
  }
  func.func @transform_3(%arg0: i32) -> (i32, i32) {
    %c0_i32 = arith.constant 0 : i32
    %c0_i32_0 = arith.constant 0 : i32
    %c0_i32_1 = arith.constant 0 : i32
    return %c0_i32, %c0_i32_0 : i32, i32
  }
  func.func @transform_4(%arg0: i32) -> (i32, i32) {
    %c0_i32 = arith.constant 0 : i32
    %c0_i32_0 = arith.constant 0 : i32
    %c0_i32_1 = arith.constant 0 : i32
    return %c0_i32, %c0_i32_0 : i32, i32
  }
  func.func @transform_5(%arg0: i32) -> (i32, i32) {
    %c0_i32 = arith.constant 0 : i32
    %c0_i32_0 = arith.constant 0 : i32
    %c0_i32_1 = arith.constant 0 : i32
    return %c0_i32, %c0_i32_0 : i32, i32
  }
  func.func @transform_6(%arg0: i32) -> (i32, i32) {
    %c0_i32 = arith.constant 0 : i32
    %c0_i32_0 = arith.constant 0 : i32
    %c0_i32_1 = arith.constant 0 : i32
    return %c0_i32, %c0_i32_0 : i32, i32
  }
  func.func @transform_7(%arg0: i32) -> (i32, i32) {
    %c0_i32 = arith.constant 0 : i32
    %c0_i32_0 = arith.constant 0 : i32
    return %arg0, %c0_i32 : i32, i32
  }
}

</mosaic_0001>

<llo_original>
// kernel: tpu_custom_call.1
$region0: #{tpu_custom_call.1}
  #allocation0 [shape = 'u32[]', space=smem, size = 0x4, offset = 0x4, fixed_abs, tag = 'smem constant byte address 0x4 - core index']
  #allocation1 [shape = 'u32[144,128]{1,0:T(1,128)}', space=vmem, size = 0x12000, scoped, tag = 'internal scratch']
  %s0 = inlined_call_operand.vmem [shape: f32[2,32], index: 0, kind: input, shape index: {}]
  %s1 = inlined_call_operand.vmem [shape: f32[2,12], index: 1, kind: input, shape index: {}]
  %s2 = inlined_call_operand.vmem [shape: f32[32,32], index: 2, kind: input, shape index: {}]
  %s3 = inlined_call_operand.vmem [shape: f32[32,64], index: 3, kind: input, shape index: {}]
  %s4 = inlined_call_operand.vmem [shape: f32[2,64], index: 4, kind: input, shape index: {}]
  %s5 = inlined_call_operand.vmem [shape: f32[64,24], index: 5, kind: input, shape index: {}]
  %s6 = inlined_call_operand.vmem [shape: f32[8,128], index: 6, kind: input, shape index: {}]
  %s7 = inlined_call_operand.hbm [shape: f32[2,144], index: 7, kind: output, shape index: {}]
  %s8 = sld [smem:[#allocation0]]
  $region38: #{tpu_custom_call.1} parent=0
    _
  %s10 = ssub.s32 1, %s8
  %s11 = scalar_select 0, %s10, %s8
  $region1: #{tpu_custom_call.1} parent=0
    #allocation2 [shape = 'u8[2048]{0}', space=vmem, size = 0x800, scoped, tag = 'output window, operand 0, single buffered']
    #allocation3 [shape = 's32[1]{0}', space=sflag, size = 0x4, scoped, tag = 'scoped memory for tpu_custom_call.1']
    %12 = vsyncpa [#allocation3], 0
    // Predicated region
    $region2: #{tpu_custom_call.1} parent=1 // pred_check
      _
    $region3: #{tpu_custom_call.1} parent=1 // pred_check_branch
      %14 = sbr.rel (0) target = $region5
    $region4: #{tpu_custom_call.1} parent=1 // pred_region
      _
    $region5: #{tpu_custom_call.1} parent=1 // pred_fallthru
      _
    // Predicated region
    $region6: #{tpu_custom_call.1} parent=1 // pred_check
      _
    $region7: #{tpu_custom_call.1} parent=1 // pred_check_branch
      %16 = sbr.rel (0) target = $region9
    $region8: #{tpu_custom_call.1} parent=1 // pred_region
      _
    $region9: #{tpu_custom_call.1} parent=1 // pred_fallthru
      _
    // Predicated region
    $region10: #{tpu_custom_call.1} parent=1 // pred_check
      _
    $region11: #{tpu_custom_call.1} parent=1 // pred_check_branch
      %18 = sbr.rel (0) target = $region13
    $region12: #{tpu_custom_call.1} parent=1 // pred_region
      _
    $region13: #{tpu_custom_call.1} parent=1 // pred_fallthru
      _
    // Predicated region
    $region14: #{tpu_custom_call.1} parent=1 // pred_check
      _
    $region15: #{tpu_custom_call.1} parent=1 // pred_check_branch
      %20 = sbr.rel (0) target = $region17
    $region16: #{tpu_custom_call.1} parent=1 // pred_region
      _
    $region17: #{tpu_custom_call.1} parent=1 // pred_fallthru
      _
    // Predicated region
    $region18: #{tpu_custom_call.1} parent=1 // pred_check
      _
    $region19: #{tpu_custom_call.1} parent=1 // pred_check_branch
      %22 = sbr.rel (0) target = $region21
    $region20: #{tpu_custom_call.1} parent=1 // pred_region
      _
    $region21: #{tpu_custom_call.1} parent=1 // pred_fallthru
      _
    // Predicated region
    $region22: #{tpu_custom_call.1} parent=1 // pred_check
      _
    $region23: #{tpu_custom_call.1} parent=1 // pred_check_branch
      %24 = sbr.rel (0) target = $region25
    $region24: #{tpu_custom_call.1} parent=1 // pred_region
      _
    $region25: #{tpu_custom_call.1} parent=1 // pred_fallthru
      _
    // Predicated region
    $region26: #{tpu_custom_call.1} parent=1 // pred_check
      _
    $region27: #{tpu_custom_call.1} parent=1 // pred_check_branch
      %26 = sbr.rel (0) target = $region29
    $region28: #{tpu_custom_call.1} parent=1 // pred_region
      _
    $region29: #{tpu_custom_call.1} parent=1 // pred_fallthru
      _
    %v27 = vld [vmem:[%s6] sm:$0x1]
    %v28 = vld [vmem:[%s6 + $0x1] sm:$0x1]
    %v29 = vld [vmem:[%s6 + $0x2] sm:$0x1]
    %v30 = vld [vmem:[%s6 + $0x3] sm:$0x1]
    %v31 = vld [vmem:[%s6 + $0x4] sm:$0x1]
    %v32 = vld [vmem:[%s6 + $0x5] sm:$0x1]
    %v33 = vld [vmem:[%s6 + $0x6] sm:$0x1]
    %v34 = vld [vmem:[%s0] sm:$0x3]
    %v35 = vld [vmem:[%s2] sm:$0xff]
    %v36 = vld [vmem:[%s2 + $0x8] sm:$0xff]
    %v37 = vld [vmem:[%s2 + $0x10] sm:$0xff]
    %v38 = vld [vmem:[%s2 + $0x18] sm:$0xff]
    %v39 = vlaneseq
    %v40 = vshrl.u32 %v39, 7
    %v41 = vsub.s32 0, %v40
    %v42 = vrot.slane %v27, %v41
    %vm43 = vcmask 261120
    %v45 = vsel %vm43, %v34, 0
    %47 = vmatprep.subr.mxu0 0.0
    %48 = vmatpush1.msra.mxu0 %v35
    %49 = vmatprep.subr.mxu0 0.0
    %50 = vmatpush1.msra.mxu0 %v36
    %51 = vmatprep.subr.mxu0 0.0
    %52 = vmatpush1.msra.mxu0 %v37
    %53 = vmatprep.subr.mxu0 0.0
    %54 = vmatpush1.msra.mxu0 %v38
    %55 = vmatprep.subr.mxu0 0.0
    %56 = vmatpush1.msra.mxu0 0.0
    %57 = vmatprep.subr.mxu0 0.0
    %58 = vmatpush1.msra.mxu0 0.0
    %59 = vmatprep.subr.mxu0 0.0
    %60 = vmatpush1.msra.mxu0 0.0
    %61 = vmatprep.subr.mxu0 0.0
    %62 = vmatpush1.msra.mxu0 0.0
    %63 = vmatprep.subr.mxu0 0.0
    %64 = vmatpush1.msra.mxu0 0.0
    %65 = vmatprep.subr.mxu0 0.0
    %66 = vmatpush1.msra.mxu0 0.0
    %67 = vmatprep.subr.mxu0 0.0
    %68 = vmatpush1.msra.mxu0 0.0
    %69 = vmatprep.subr.mxu0 0.0
    %70 = vmatpush1.msra.mxu0 0.0
    %71 = vmatprep.subr.mxu0 0.0
    %72 = vmatpush1.msra.mxu0 0.0
    %73 = vmatprep.subr.mxu0 0.0
    %74 = vmatpush1.msra.mxu0 0.0
    %75 = vmatprep.subr.mxu0 0.0
    %76 = vmatpush1.msra.mxu0 0.0
    %77 = vmatprep.subr.mxu0 0.0
    %78 = vmatpush1.msra.mxu0 0.0
    %79 = vmatprep.subr.mxu0 0.0
    %80 = vmatpush1.msra.mxu0 0.0
    %81 = vmatprep.subr.mxu0 0.0
    %82 = vmatpush1.msra.mxu0 0.0
    %83 = vmatprep.subr.mxu0 0.0
    %84 = vmatpush1.msra.mxu0 0.0
    %85 = vmatprep.subr.mxu0 0.0
    %86 = vmatpush1.msra.mxu0 0.0
    %87 = vmatprep.subr.mxu0 0.0
    %88 = vmatpush1.msra.mxu0 0.0
    %89 = vmatprep.subr.mxu0 0.0
    %90 = vmatpush1.msra.mxu0 0.0
    %91 = vmatprep.subr.mxu0 0.0
    %92 = vmatpush1.msra.mxu0 0.0
    %93 = vmatprep.subr.mxu0 0.0
    %94 = vmatpush1.msra.mxu0 0.0
    %95 = vmatprep.subr.mxu0 0.0
    %96 = vmatpush1.msra.mxu0 0.0
    %97 = vmatprep.subr.mxu0 0.0
    %98 = vmatpush1.msra.mxu0 0.0
    %99 = vmatprep.subr.mxu0 0.0
    %100 = vmatpush1.msra.mxu0 0.0
    %101 = vmatprep.subr.mxu0 0.0
    %102 = vmatpush1.msra.mxu0 0.0
    %103 = vmatprep.subr.mxu0 0.0
    %104 = vmatpush1.msra.mxu0 0.0
    %105 = vmatprep.subr.mxu0 0.0
    %106 = vmatpush1.msra.mxu0 0.0
    %107 = vmatprep.subr.mxu0 0.0
    %108 = vmatpush1.msra.mxu0 0.0
    %109 = vmatprep.subr.mxu0 0.0
    %110 = vmatpush1.msra.mxu0 0.0
    %111 = vmatprep.mubr.f32.mxu0 0.0
    %112 = vmatmul.mubr.f32.gmra.mrb[0].mxu0 %v45
    %v113 = vpop.f32.mrb[0].mxu0
    %v114 = vadd.f32 %v42, %v113
    %v115 = vpop.f32.mrb[0].mxu0
    %116 = vdwg.mxu0
    %vm117 = vcmask 254976
    %v118 = vsel %vm117, %v114, 0.0
    %119 = vadd.xlane.f32.xlu0 %v118
    %v120 = vpop.xlane.xlu0 %119
    %v121 = vrcp.pop 32.0
    %v122 = vmul.f32 %v120, %v121
    %v123 = vsub.f32 %v114, %v122
    %v124 = vmul.f32 %v123, %v123
    %v125 = vsel %vm117, %v124, 0.0
    %126 = vadd.xlane.f32.xlu0 %v125
    %v127 = vpop.xlane.xlu0 %126
    %v128 = vmul.f32 %v127, %v121
    %v129 = vadd.f32 %v128, 1e-05
    %v130 = vrsqrt.pop %v129
    %v131 = vmul.f32 %v123, %v130
    %v132 = vlaneseq
    %v133 = vshrl.u32 %v132, 7
    %v134 = vsub.s32 0, %v133
    %v135 = vrot.slane %v28, %v134
    %v136 = vmul.f32 %v131, %v135
    %v137 = vlaneseq
    %v138 = vshrl.u32 %v137, 7
    %v139 = vsub.s32 0, %v138
    %v140 = vrot.slane %v29, %v139
    %v141 = vadd.f32 %v136, %v140
    %vm142 = vcmp.gt.f32.partialorder %v141, 0.0
    %v143 = vmul.f32 %v141, 0.01
    %v144 = vsel %vm142, %v141, %v143
    %v145 = vld [vmem:[%s3] sm:$0xff]
    %v146 = vld [vmem:[%s3 + $0x8] sm:$0xff]
    %v147 = vld [vmem:[%s3 + $0x10] sm:$0xff]
    %v148 = vld [vmem:[%s3 + $0x18] sm:$0xff]
    %v149 = vlaneseq
    %v150 = vshrl.u32 %v149, 7
    %v151 = vsub.s32 0, %v150
    %v152 = vrot.slane %v30, %v151
    %v154 = vsel %vm43, %v144, 0
    %156 = vmatprep.subr.mxu0 0.0
    %157 = vmatpush1.msra.mxu0 %v145
    %158 = vmatprep.subr.mxu0 0.0
    %159 = vmatpush1.msra.mxu0 %v146
    %160 = vmatprep.subr.mxu0 0.0
    %161 = vmatpush1.msra.mxu0 %v147
    %162 = vmatprep.subr.mxu0 0.0
    %163 = vmatpush1.msra.mxu0 %v148
    %164 = vmatprep.subr.mxu0 0.0
    %165 = vmatpush1.msra.mxu0 0.0
    %166 = vmatprep.subr.mxu0 0.0
    %167 = vmatpush1.msra.mxu0 0.0
    %168 = vmatprep.subr.mxu0 0.0
    %169 = vmatpush1.msra.mxu0 0.0
    %170 = vmatprep.subr.mxu0 0.0
    %171 = vmatpush1.msra.mxu0 0.0
    %172 = vmatprep.subr.mxu0 0.0
    %173 = vmatpush1.msra.mxu0 0.0
    %174 = vmatprep.subr.mxu0 0.0
    %175 = vmatpush1.msra.mxu0 0.0
    %176 = vmatprep.subr.mxu0 0.0
    %177 = vmatpush1.msra.mxu0 0.0
    %178 = vmatprep.subr.mxu0 0.0
    %179 = vmatpush1.msra.mxu0 0.0
    %180 = vmatprep.subr.mxu0 0.0
    %181 = vmatpush1.msra.mxu0 0.0
    %182 = vmatprep.subr.mxu0 0.0
    %183 = vmatpush1.msra.mxu0 0.0
    %184 = vmatprep.subr.mxu0 0.0
    %185 = vmatpush1.msra.mxu0 0.0
    %186 = vmatprep.subr.mxu0 0.0
    %187 = vmatpush1.msra.mxu0 0.0
    %188 = vmatprep.subr.mxu0 0.0
    %189 = vmatpush1.msra.mxu0 0.0
    %190 = vmatprep.subr.mxu0 0.0
    %191 = vmatpush1.msra.mxu0 0.0
    %192 = vmatprep.subr.mxu0 0.0
    %193 = vmatpush1.msra.mxu0 0.0
    %194 = vmatprep.subr.mxu0 0.0
    %195 = vmatpush1.msra.mxu0 0.0
    %196 = vmatprep.subr.mxu0 0.0
    %197 = vmatpush1.msra.mxu0 0.0
    %198 = vmatprep.subr.mxu0 0.0
    %199 = vmatpush1.msra.mxu0 0.0
    %200 = vmatprep.subr.mxu0 0.0
    %201 = vmatpush1.msra.mxu0 0.0
    %202 = vmatprep.subr.mxu0 0.0
    %203 = vmatpush1.msra.mxu0 0.0
    %204 = vmatprep.subr.mxu0 0.0
    %205 = vmatpush1.msra.mxu0 0.0
    %206 = vmatprep.subr.mxu0 0.0
    %207 = vmatpush1.msra.mxu0 0.0
    %208 = vmatprep.subr.mxu0 0.0
    %209 = vmatpush1.msra.mxu0 0.0
    %210 = vmatprep.subr.mxu0 0.0
    %211 = vmatpush1.msra.mxu0 0.0
    %212 = vmatprep.subr.mxu0 0.0
    %213 = vmatpush1.msra.mxu0 0.0
    %214 = vmatprep.subr.mxu0 0.0
    %215 = vmatpush1.msra.mxu0 0.0
    %216 = vmatprep.subr.mxu0 0.0
    %217 = vmatpush1.msra.mxu0 0.0
    %218 = vmatprep.subr.mxu0 0.0
    %219 = vmatpush1.msra.mxu0 0.0
    %220 = vmatprep.mubr.f32.mxu0 0.0
    %221 = vmatmul.mubr.f32.gmra.mrb[0].mxu0 %v154
    %v222 = vpop.f32.mrb[0].mxu0
    %v223 = vadd.f32 %v152, %v222
    %v224 = vpop.f32.mrb[0].mxu0
    %225 = vdwg.mxu0
    %v226 = vld [vmem:[%s4] sm:$0x3]
    %v227 = vld [vmem:[%s5] sm:$0xff]
    %v228 = vld [vmem:[%s5 + $0x8] sm:$0xff]
    %v229 = vld [vmem:[%s5 + $0x10] sm:$0xff]
    %v230 = vld [vmem:[%s5 + $0x18] sm:$0xff]
    %v231 = vld [vmem:[%s5 + $0x20] sm:$0xff]
    %v232 = vld [vmem:[%s5 + $0x28] sm:$0xff]
    %v233 = vld [vmem:[%s5 + $0x30] sm:$0xff]
    %v234 = vld [vmem:[%s5 + $0x38] sm:$0xff]
    %v235 = vld [vmem:[%s1] sm:$0x3]
    %237 = vset.pattern.permute.xlu0 0
    %238 = vperm.xlu0 %237, %v235
    %v239 = vpop.permute.xlu0 %238
    %v241 = vlaneseq
    %v242 = vshrl.u32 %v241, 7
    %v243 = vsub.s32 0, %v242
    %v244 = vrot.slane %v226, %v243
    %v245 = vmul.f32 %v239, %v244
    %v246 = vadd.f32 %v223, %v245
    %247 = vset.pattern.permute.xlu0 6
    %248 = vperm.xlu0 %247, %v235
    %v249 = vpop.permute.xlu0 %248
    %v251 = vlaneseq
    %v252 = vshrl.u32 %v251, 7
    %v253 = vsub.s32 1, %v252
    %v254 = vrot.slane %v226, %v253
    %v255 = vmul.f32 %v249, %v254
    %v256 = vadd.f32 %v246, %v255
    %vm257 = vcmask 517120
    %v258 = vsel %vm257, %v256, 0.0
    %259 = vadd.xlane.f32.xlu0 %v258
    %v260 = vpop.xlane.xlu0 %259
    %v261 = vrcp.pop 64.0
    %v262 = vmul.f32 %v260, %v261
    %v263 = vsub.f32 %v256, %v262
    %v264 = vmul.f32 %v263, %v263
    %v265 = vsel %vm257, %v264, 0.0
    %266 = vadd.xlane.f32.xlu0 %v265
    %v267 = vpop.xlane.xlu0 %266
    %v268 = vmul.f32 %v267, %v261
    %v269 = vadd.f32 %v268, 1e-05
    %v270 = vrsqrt.pop %v269
    %v271 = vmul.f32 %v263, %v270
    %v272 = vlaneseq
    %v273 = vshrl.u32 %v272, 7
    %v274 = vsub.s32 0, %v273
    %v275 = vrot.slane %v31, %v274
    %v276 = vmul.f32 %v271, %v275
    %v277 = vlaneseq
    %v278 = vshrl.u32 %v277, 7
    %v279 = vsub.s32 0, %v278
    %v280 = vrot.slane %v32, %v279
    %v281 = vadd.f32 %v276, %v280
    %vm282 = vcmp.gt.f32.partialorder %v281, 0.0
    %v283 = vmul.f32 %v281, 0.01
    %v284 = vsel %vm282, %v281, %v283
    %v285 = vlaneseq
    %v286 = vshrl.u32 %v285, 7
    %v287 = vsub.s32 0, %v286
    %v288 = vrot.slane %v33, %v287
    %vm289 = vcmask 523264
    %v291 = vsel %vm289, %v284, 0
    %293 = vmatprep.subr.mxu0 0.0
    %294 = vmatpush1.msra.mxu0 %v227
    %295 = vmatprep.subr.mxu0 0.0
    %296 = vmatpush1.msra.mxu0 %v228
    %297 = vmatprep.subr.mxu0 0.0
    %298 = vmatpush1.msra.mxu0 %v229
    %299 = vmatprep.subr.mxu0 0.0
    %300 = vmatpush1.msra.mxu0 %v230
    %301 = vmatprep.subr.mxu0 0.0
    %302 = vmatpush1.msra.mxu0 %v231
    %303 = vmatprep.subr.mxu0 0.0
    %304 = vmatpush1.msra.mxu0 %v232
    %305 = vmatprep.subr.mxu0 0.0
    %306 = vmatpush1.msra.mxu0 %v233
    %307 = vmatprep.subr.mxu0 0.0
    %308 = vmatpush1.msra.mxu0 %v234
    %309 = vmatprep.subr.mxu0 0.0
    %310 = vmatpush1.msra.mxu0 0.0
    %311 = vmatprep.subr.mxu0 0.0
    %312 = vmatpush1.msra.mxu0 0.0
    %313 = vmatprep.subr.mxu0 0.0
    %314 = vmatpush1.msra.mxu0 0.0
    %315 = vmatprep.subr.mxu0 0.0
    %316 = vmatpush1.msra.mxu0 0.0
    %317 = vmatprep.subr.mxu0 0.0
    %318 = vmatpush1.msra.mxu0 0.0
    %319 = vmatprep.subr.mxu0 0.0
    %320 = vmatpush1.msra.mxu0 0.0
    %321 = vmatprep.subr.mxu0 0.0
    %322 = vmatpush1.msra.mxu0 0.0
    %323 = vmatprep.subr.mxu0 0.0
    %324 = vmatpush1.msra.mxu0 0.0
    %325 = vmatprep.subr.mxu0 0.0
    %326 = vmatpush1.msra.mxu0 0.0
    %327 = vmatprep.subr.mxu0 0.0
    %328 = vmatpush1.msra.mxu0 0.0
    %329 = vmatprep.subr.mxu0 0.0
    %330 = vmatpush1.msra.mxu0 0.0
    %331 = vmatprep.subr.mxu0 0.0
    %332 = vmatpush1.msra.mxu0 0.0
    %333 = vmatprep.subr.mxu0 0.0
    %334 = vmatpush1.msra.mxu0 0.0
    %335 = vmatprep.subr.mxu0 0.0
    %336 = vmatpush1.msra.mxu0 0.0
    %337 = vmatprep.subr.mxu0 0.0
    %338 = vmatpush1.msra.mxu0 0.0
    %339 = vmatprep.subr.mxu0 0.0
    %340 = vmatpush1.msra.mxu0 0.0
    %341 = vmatprep.subr.mxu0 0.0
    %342 = vmatpush1.msra.mxu0 0.0
    %343 = vmatprep.subr.mxu0 0.0
    %344 = vmatpush1.msra.mxu0 0.0
    %345 = vmatprep.subr.mxu0 0.0
    %346 = vmatpush1.msra.mxu0 0.0
    %347 = vmatprep.subr.mxu0 0.0
    %348 = vmatpush1.msra.mxu0 0.0
    %349 = vmatprep.subr.mxu0 0.0
    %350 = vmatpush1.msra.mxu0 0.0
    %351 = vmatprep.subr.mxu0 0.0
    %352 = vmatpush1.msra.mxu0 0.0
    %353 = vmatprep.subr.mxu0 0.0
    %354 = vmatpush1.msra.mxu0 0.0
    %355 = vmatprep.subr.mxu0 0.0
    %356 = vmatpush1.msra.mxu0 0.0
    %357 = vmatprep.mubr.f32.mxu0 0.0
    %358 = vmatmul.mubr.f32.gmra.mrb[0].mxu0 %v291
    %v359 = vpop.f32.mrb[0].mxu0
    %v360 = vadd.f32 %v288, %v359
    %v361 = vpop.f32.mrb[0].mxu0
    %362 = vdwg.mxu0
    %vm363 = vcmask 189440
    %364 = vst.msk [vmem:[#allocation2] sm:$0x3] %vm363, %v360
    %365 = vset.pattern.permute.xlu0 1
    %366 = vperm.xlu0 %365, %v235
    %v367 = vpop.permute.xlu0 %366
    %v369 = vmul.f32 %v367, %v244
    %v370 = vadd.f32 %v223, %v369
    %371 = vset.pattern.permute.xlu0 7
    %372 = vperm.xlu0 %371, %v235
    %v373 = vpop.permute.xlu0 %372
    %v375 = vmul.f32 %v373, %v254
    %v376 = vadd.f32 %v370, %v375
    %v377 = vsel %vm257, %v376, 0.0
    %378 = vadd.xlane.f32.xlu0 %v377
    %v379 = vpop.xlane.xlu0 %378
    %v380 = vmul.f32 %v379, %v261
    %v381 = vsub.f32 %v376, %v380
    %v382 = vmul.f32 %v381, %v381
    %v383 = vsel %vm257, %v382, 0.0
    %384 = vadd.xlane.f32.xlu0 %v383
    %v385 = vpop.xlane.xlu0 %384
    %v386 = vmul.f32 %v385, %v261
    %v387 = vadd.f32 %v386, 1e-05
    %v388 = vrsqrt.pop %v387
    %v389 = vmul.f32 %v381, %v388
    %v390 = vmul.f32 %v389, %v275
    %v391 = vadd.f32 %v390, %v280
    %vm392 = vcmp.gt.f32.partialorder %v391, 0.0
    %v393 = vmul.f32 %v391, 0.01
    %v394 = vsel %vm392, %v391, %v393
    %v396 = vsel %vm289, %v394, 0
    %398 = vmatprep.subr.mxu0 0.0
    %399 = vmatpush1.msra.mxu0 %v227
    %400 = vmatprep.subr.mxu0 0.0
    %401 = vmatpush1.msra.mxu0 %v228
    %402 = vmatprep.subr.mxu0 0.0
    %403 = vmatpush1.msra.mxu0 %v229
    %404 = vmatprep.subr.mxu0 0.0
    %405 = vmatpush1.msra.mxu0 %v230
    %406 = vmatprep.subr.mxu0 0.0
    %407 = vmatpush1.msra.mxu0 %v231
    %408 = vmatprep.subr.mxu0 0.0
    %409 = vmatpush1.msra.mxu0 %v232
    %410 = vmatprep.subr.mxu0 0.0
    %411 = vmatpush1.msra.mxu0 %v233
    %412 = vmatprep.subr.mxu0 0.0
    %413 = vmatpush1.msra.mxu0 %v234
    %414 = vmatprep.subr.mxu0 0.0
    %415 = vmatpush1.msra.mxu0 0.0
    %416 = vmatprep.subr.mxu0 0.0
    %417 = vmatpush1.msra.mxu0 0.0
    %418 = vmatprep.subr.mxu0 0.0
    %419 = vmatpush1.msra.mxu0 0.0
    %420 = vmatprep.subr.mxu0 0.0
    %421 = vmatpush1.msra.mxu0 0.0
    %422 = vmatprep.subr.mxu0 0.0
    %423 = vmatpush1.msra.mxu0 0.0
    %424 = vmatprep.subr.mxu0 0.0
    %425 = vmatpush1.msra.mxu0 0.0
    %426 = vmatprep.subr.mxu0 0.0
    %427 = vmatpush1.msra.mxu0 0.0
    %428 = vmatprep.subr.mxu0 0.0
    %429 = vmatpush1.msra.mxu0 0.0
    %430 = vmatprep.subr.mxu0 0.0
    %431 = vmatpush1.msra.mxu0 0.0
    %432 = vmatprep.subr.mxu0 0.0
    %433 = vmatpush1.msra.mxu0 0.0
    %434 = vmatprep.subr.mxu0 0.0
    %435 = vmatpush1.msra.mxu0 0.0
    %436 = vmatprep.subr.mxu0 0.0
    %437 = vmatpush1.msra.mxu0 0.0
    %438 = vmatprep.subr.mxu0 0.0
    %439 = vmatpush1.msra.mxu0 0.0
    %440 = vmatprep.subr.mxu0 0.0
    %441 = vmatpush1.msra.mxu0 0.0
    %442 = vmatprep.subr.mxu0 0.0
    %443 = vmatpush1.msra.mxu0 0.0
    %444 = vmatprep.subr.mxu0 0.0
    %445 = vmatpush1.msra.mxu0 0.0
    %446 = vmatprep.subr.mxu0 0.0
    %447 = vmatpush1.msra.mxu0 0.0
    %448 = vmatprep.subr.mxu0 0.0
    %449 = vmatpush1.msra.mxu0 0.0
    %450 = vmatprep.subr.mxu0 0.0
    %451 = vmatpush1.msra.mxu0 0.0
    %452 = vmatprep.subr.mxu0 0.0
    %453 = vmatpush1.msra.mxu0 0.0
    %454 = vmatprep.subr.mxu0 0.0
    %455 = vmatpush1.msra.mxu0 0.0
    %456 = vmatprep.subr.mxu0 0.0
    %457 = vmatpush1.msra.mxu0 0.0
    %458 = vmatprep.subr.mxu0 0.0
    %459 = vmatpush1.msra.mxu0 0.0
    %460 = vmatprep.subr.mxu0 0.0
    %461 = vmatpush1.msra.mxu0 0.0
    %462 = vmatprep.mubr.f32.mxu0 0.0
    %463 = vmatmul.mubr.f32.gmra.mrb[0].mxu0 %v396
    %v464 = vpop.f32.mrb[0].mxu0
    %v465 = vadd.f32 %v288, %v464
    %v466 = vpop.f32.mrb[0].mxu0
    %467 = vdwg.mxu0
    %v470 = vunpack.c.l.s4 1983009808
    %v471 = vunpack.c.0.s8 %v470
    %v472 = vlaneseq
    %v473 = vshrl.u32 %v472, 7
    %v474 = vsub.s32 %v471, %v473
    %v475 = vrot.slane %v465, %v474
    %476 = vrot.lane.b32.xlu0 %v475, 24
    %v477 = vpop.permute.xlu0 %476
    %vm479 = vcmask 386240
    %480 = vst.msk [vmem:[#allocation2] sm:$0x3] %vm479, %v477
    %481 = vset.pattern.permute.xlu0 2
    %482 = vperm.xlu0 %481, %v235
    %v483 = vpop.permute.xlu0 %482
    %v485 = vmul.f32 %v483, %v244
    %v486 = vadd.f32 %v223, %v485
    %487 = vset.pattern.permute.xlu0 8
    %488 = vperm.xlu0 %487, %v235
    %v489 = vpop.permute.xlu0 %488
    %v491 = vmul.f32 %v489, %v254
    %v492 = vadd.f32 %v486, %v491
    %v493 = vsel %vm257, %v492, 0.0
    %494 = vadd.xlane.f32.xlu0 %v493
    %v495 = vpop.xlane.xlu0 %494
    %v496 = vmul.f32 %v495, %v261
    %v497 = vsub.f32 %v492, %v496
    %v498 = vmul.f32 %v497, %v497
    %v499 = vsel %vm257, %v498, 0.0
    %500 = vadd.xlane.f32.xlu0 %v499
    %v501 = vpop.xlane.xlu0 %500
    %v502 = vmul.f32 %v501, %v261
    %v503 = vadd.f32 %v502, 1e-05
    %v504 = vrsqrt.pop %v503
    %v505 = vmul.f32 %v497, %v504
    %v506 = vmul.f32 %v505, %v275
    %v507 = vadd.f32 %v506, %v280
    %vm508 = vcmp.gt.f32.partialorder %v507, 0.0
    %v509 = vmul.f32 %v507, 0.01
    %v510 = vsel %vm508, %v507, %v509
    %v512 = vsel %vm289, %v510, 0
    %514 = vmatprep.subr.mxu0 0.0
    %515 = vmatpush1.msra.mxu0 %v227
    %516 = vmatprep.subr.mxu0 0.0
    %517 = vmatpush1.msra.mxu0 %v228
    %518 = vmatprep.subr.mxu0 0.0
    %519 = vmatpush1.msra.mxu0 %v229
    %520 = vmatprep.subr.mxu0 0.0
    %521 = vmatpush1.msra.mxu0 %v230
    %522 = vmatprep.subr.mxu0 0.0
    %523 = vmatpush1.msra.mxu0 %v231
    %524 = vmatprep.subr.mxu0 0.0
    %525 = vmatpush1.msra.mxu0 %v232
    %526 = vmatprep.subr.mxu0 0.0
    %527 = vmatpush1.msra.mxu0 %v233
    %528 = vmatprep.subr.mxu0 0.0
    %529 = vmatpush1.msra.mxu0 %v234
    %530 = vmatprep.subr.mxu0 0.0
    %531 = vmatpush1.msra.mxu0 0.0
    %532 = vmatprep.subr.mxu0 0.0
    %533 = vmatpush1.msra.mxu0 0.0
    %534 = vmatprep.subr.mxu0 0.0
    %535 = vmatpush1.msra.mxu0 0.0
    %536 = vmatprep.subr.mxu0 0.0
    %537 = vmatpush1.msra.mxu0 0.0
    %538 = vmatprep.subr.mxu0 0.0
    %539 = vmatpush1.msra.mxu0 0.0
    %540 = vmatprep.subr.mxu0 0.0
    %541 = vmatpush1.msra.mxu0 0.0
    %542 = vmatprep.subr.mxu0 0.0
    %543 = vmatpush1.msra.mxu0 0.0
    %544 = vmatprep.subr.mxu0 0.0
    %545 = vmatpush1.msra.mxu0 0.0
    %546 = vmatprep.subr.mxu0 0.0
    %547 = vmatpush1.msra.mxu0 0.0
    %548 = vmatprep.subr.mxu0 0.0
    %549 = vmatpush1.msra.mxu0 0.0
    %550 = vmatprep.subr.mxu0 0.0
    %551 = vmatpush1.msra.mxu0 0.0
    %552 = vmatprep.subr.mxu0 0.0
    %553 = vmatpush1.msra.mxu0 0.0
    %554 = vmatprep.subr.mxu0 0.0
    %555 = vmatpush1.msra.mxu0 0.0
    %556 = vmatprep.subr.mxu0 0.0
    %557 = vmatpush1.msra.mxu0 0.0
    %558 = vmatprep.subr.mxu0 0.0
    %559 = vmatpush1.msra.mxu0 0.0
    %560 = vmatprep.subr.mxu0 0.0
    %561 = vmatpush1.msra.mxu0 0.0
    %562 = vmatprep.subr.mxu0 0.0
    %563 = vmatpush1.msra.mxu0 0.0
    %564 = vmatprep.subr.mxu0 0.0
    %565 = vmatpush1.msra.mxu0 0.0
    %566 = vmatprep.subr.mxu0 0.0
    %567 = vmatpush1.msra.mxu0 0.0
    %568 = vmatprep.subr.mxu0 0.0
    %569 = vmatpush1.msra.mxu0 0.0
    %570 = vmatprep.subr.mxu0 0.0
    %571 = vmatpush1.msra.mxu0 0.0
    %572 = vmatprep.subr.mxu0 0.0
    %573 = vmatpush1.msra.mxu0 0.0
    %574 = vmatprep.subr.mxu0 0.0
    %575 = vmatpush1.msra.mxu0 0.0
    %576 = vmatprep.subr.mxu0 0.0
    %577 = vmatpush1.msra.mxu0 0.0
    %578 = vmatprep.mubr.f32.mxu0 0.0
    %579 = vmatmul.mubr.f32.gmra.mrb[0].mxu0 %v512
    %v580 = vpop.f32.mrb[0].mxu0
    %v581 = vadd.f32 %v288, %v580
    %v582 = vpop.f32.mrb[0].mxu0
    %583 = vdwg.mxu0
    %v586 = vunpack.c.l.s4 1983009808
    %v587 = vunpack.c.0.s8 %v586
    %v588 = vlaneseq
    %v589 = vshrl.u32 %v588, 7
    %v590 = vsub.s32 %v587, %v589
    %v591 = vrot.slane %v581, %v590
    %592 = vrot.lane.b32.xlu0 %v591, 48
    %v593 = vpop.permute.xlu0 %592
    %vm595 = vcmask 583040
    %596 = vst.msk [vmem:[#allocation2] sm:$0x3] %vm595, %v593
    %597 = vset.pattern.permute.xlu0 3
    %598 = vperm.xlu0 %597, %v235
    %v599 = vpop.permute.xlu0 %598
    %v601 = vmul.f32 %v599, %v244
    %v602 = vadd.f32 %v223, %v601
    %603 = vset.pattern.permute.xlu0 9
    %604 = vperm.xlu0 %603, %v235
    %v605 = vpop.permute.xlu0 %604
    %v607 = vmul.f32 %v605, %v254
    %v608 = vadd.f32 %v602, %v607
    %v609 = vsel %vm257, %v608, 0.0
    %610 = vadd.xlane.f32.xlu0 %v609
    %v611 = vpop.xlane.xlu0 %610
    %v612 = vmul.f32 %v611, %v261
    %v613 = vsub.f32 %v608, %v612
    %v614 = vmul.f32 %v613, %v613
    %v615 = vsel %vm257, %v614, 0.0
    %616 = vadd.xlane.f32.xlu0 %v615
    %v617 = vpop.xlane.xlu0 %616
    %v618 = vmul.f32 %v617, %v261
    %v619 = vadd.f32 %v618, 1e-05
    %v620 = vrsqrt.pop %v619
    %v621 = vmul.f32 %v613, %v620
    %v622 = vmul.f32 %v621, %v275
    %v623 = vadd.f32 %v622, %v280
    %vm624 = vcmp.gt.f32.partialorder %v623, 0.0
    %v625 = vmul.f32 %v623, 0.01
    %v626 = vsel %vm624, %v623, %v625
    %v628 = vsel %vm289, %v626, 0
    %630 = vmatprep.subr.mxu0 0.0
    %631 = vmatpush1.msra.mxu0 %v227
    %632 = vmatprep.subr.mxu0 0.0
    %633 = vmatpush1.msra.mxu0 %v228
    %634 = vmatprep.subr.mxu0 0.0
    %635 = vmatpush1.msra.mxu0 %v229
    %636 = vmatprep.subr.mxu0 0.0
    %637 = vmatpush1.msra.mxu0 %v230
    %638 = vmatprep.subr.mxu0 0.0
    %639 = vmatpush1.msra.mxu0 %v231
    %640 = vmatprep.subr.mxu0 0.0
    %641 = vmatpush1.msra.mxu0 %v232
    %642 = vmatprep.subr.mxu0 0.0
    %643 = vmatpush1.msra.mxu0 %v233
    %644 = vmatprep.subr.mxu0 0.0
    %645 = vmatpush1.msra.mxu0 %v234
    %646 = vmatprep.subr.mxu0 0.0
    %647 = vmatpush1.msra.mxu0 0.0
    %648 = vmatprep.subr.mxu0 0.0
    %649 = vmatpush1.msra.mxu0 0.0
    %650 = vmatprep.subr.mxu0 0.0
    %651 = vmatpush1.msra.mxu0 0.0
    %652 = vmatprep.subr.mxu0 0.0
    %653 = vmatpush1.msra.mxu0 0.0
    %654 = vmatprep.subr.mxu0 0.0
    %655 = vmatpush1.msra.mxu0 0.0
    %656 = vmatprep.subr.mxu0 0.0
    %657 = vmatpush1.msra.mxu0 0.0
    %658 = vmatprep.subr.mxu0 0.0
    %659 = vmatpush1.msra.mxu0 0.0
    %660 = vmatprep.subr.mxu0 0.0
    %661 = vmatpush1.msra.mxu0 0.0
    %662 = vmatprep.subr.mxu0 0.0
    %663 = vmatpush1.msra.mxu0 0.0
    %664 = vmatprep.subr.mxu0 0.0
    %665 = vmatpush1.msra.mxu0 0.0
    %666 = vmatprep.subr.mxu0 0.0
    %667 = vmatpush1.msra.mxu0 0.0
    %668 = vmatprep.subr.mxu0 0.0
    %669 = vmatpush1.msra.mxu0 0.0
    %670 = vmatprep.subr.mxu0 0.0
    %671 = vmatpush1.msra.mxu0 0.0
    %672 = vmatprep.subr.mxu0 0.0
    %673 = vmatpush1.msra.mxu0 0.0
    %674 = vmatprep.subr.mxu0 0.0
    %675 = vmatpush1.msra.mxu0 0.0
    %676 = vmatprep.subr.mxu0 0.0
    %677 = vmatpush1.msra.mxu0 0.0
    %678 = vmatprep.subr.mxu0 0.0
    %679 = vmatpush1.msra.mxu0 0.0
    %680 = vmatprep.subr.mxu0 0.0
    %681 = vmatpush1.msra.mxu0 0.0
    %682 = vmatprep.subr.mxu0 0.0
    %683 = vmatpush1.msra.mxu0 0.0
    %684 = vmatprep.subr.mxu0 0.0
    %685 = vmatpush1.msra.mxu0 0.0
    %686 = vmatprep.subr.mxu0 0.0
    %687 = vmatpush1.msra.mxu0 0.0
    %688 = vmatprep.subr.mxu0 0.0
    %689 = vmatpush1.msra.mxu0 0.0
    %690 = vmatprep.subr.mxu0 0.0
    %691 = vmatpush1.msra.mxu0 0.0
    %692 = vmatprep.subr.mxu0 0.0
    %693 = vmatpush1.msra.mxu0 0.0
    %694 = vmatprep.mubr.f32.mxu0 0.0
    %695 = vmatmul.mubr.f32.gmra.mrb[0].mxu0 %v628
    %v696 = vpop.f32.mrb[0].mxu0
    %v697 = vadd.f32 %v288, %v696
    %v698 = vpop.f32.mrb[0].mxu0
    %699 = vdwg.mxu0
    %v702 = vunpack.c.l.s4 1983009808
    %v703 = vunpack.c.0.s8 %v702
    %v704 = vlaneseq
    %v705 = vshrl.u32 %v704, 7
    %v706 = vsub.s32 %v703, %v705
    %v707 = vrot.slane %v697, %v706
    %708 = vrot.lane.b32.xlu0 %v707, 72
    %v709 = vpop.permute.xlu0 %708
    %vm711 = vcmask 779840
    %712 = vst.msk [vmem:[#allocation2] sm:$0x3] %vm711, %v709
    %713 = vset.pattern.permute.xlu0 4
    %714 = vperm.xlu0 %713, %v235
    %v715 = vpop.permute.xlu0 %714
    %v717 = vmul.f32 %v715, %v244
    %v718 = vadd.f32 %v223, %v717
    %719 = vset.pattern.permute.xlu0 10
    %720 = vperm.xlu0 %719, %v235
    %v721 = vpop.permute.xlu0 %720
    %v723 = vmul.f32 %v721, %v254
    %v724 = vadd.f32 %v718, %v723
    %v725 = vsel %vm257, %v724, 0.0
    %726 = vadd.xlane.f32.xlu0 %v725
    %v727 = vpop.xlane.xlu0 %726
    %v728 = vmul.f32 %v727, %v261
    %v729 = vsub.f32 %v724, %v728
    %v730 = vmul.f32 %v729, %v729
    %v731 = vsel %vm257, %v730, 0.0
    %732 = vadd.xlane.f32.xlu0 %v731
    %v733 = vpop.xlane.xlu0 %732
    %v734 = vmul.f32 %v733, %v261
    %v735 = vadd.f32 %v734, 1e-05
    %v736 = vrsqrt.pop %v735
    %v737 = vmul.f32 %v729, %v736
    %v738 = vmul.f32 %v737, %v275
    %v739 = vadd.f32 %v738, %v280
    %vm740 = vcmp.gt.f32.partialorder %v739, 0.0
    %v741 = vmul.f32 %v739, 0.01
    %v742 = vsel %vm740, %v739, %v741
    %v744 = vsel %vm289, %v742, 0
    %746 = vmatprep.subr.mxu0 0.0
    %747 = vmatpush1.msra.mxu0 %v227
    %748 = vmatprep.subr.mxu0 0.0
    %749 = vmatpush1.msra.mxu0 %v228
    %750 = vmatprep.subr.mxu0 0.0
    %751 = vmatpush1.msra.mxu0 %v229
    %752 = vmatprep.subr.mxu0 0.0
    %753 = vmatpush1.msra.mxu0 %v230
    %754 = vmatprep.subr.mxu0 0.0
    %755 = vmatpush1.msra.mxu0 %v231
    %756 = vmatprep.subr.mxu0 0.0
    %757 = vmatpush1.msra.mxu0 %v232
    %758 = vmatprep.subr.mxu0 0.0
    %759 = vmatpush1.msra.mxu0 %v233
    %760 = vmatprep.subr.mxu0 0.0
    %761 = vmatpush1.msra.mxu0 %v234
    %762 = vmatprep.subr.mxu0 0.0
    %763 = vmatpush1.msra.mxu0 0.0
    %764 = vmatprep.subr.mxu0 0.0
    %765 = vmatpush1.msra.mxu0 0.0
    %766 = vmatprep.subr.mxu0 0.0
    %767 = vmatpush1.msra.mxu0 0.0
    %768 = vmatprep.subr.mxu0 0.0
    %769 = vmatpush1.msra.mxu0 0.0
    %770 = vmatprep.subr.mxu0 0.0
    %771 = vmatpush1.msra.mxu0 0.0
    %772 = vmatprep.subr.mxu0 0.0
    %773 = vmatpush1.msra.mxu0 0.0
    %774 = vmatprep.subr.mxu0 0.0
    %775 = vmatpush1.msra.mxu0 0.0
    %776 = vmatprep.subr.mxu0 0.0
    %777 = vmatpush1.msra.mxu0 0.0
    %778 = vmatprep.subr.mxu0 0.0
    %779 = vmatpush1.msra.mxu0 0.0
    %780 = vmatprep.subr.mxu0 0.0
    %781 = vmatpush1.msra.mxu0 0.0
    %782 = vmatprep.subr.mxu0 0.0
    %783 = vmatpush1.msra.mxu0 0.0
    %784 = vmatprep.subr.mxu0 0.0
    %785 = vmatpush1.msra.mxu0 0.0
    %786 = vmatprep.subr.mxu0 0.0
    %787 = vmatpush1.msra.mxu0 0.0
    %788 = vmatprep.subr.mxu0 0.0
    %789 = vmatpush1.msra.mxu0 0.0
    %790 = vmatprep.subr.mxu0 0.0
    %791 = vmatpush1.msra.mxu0 0.0
    %792 = vmatprep.subr.mxu0 0.0
    %793 = vmatpush1.msra.mxu0 0.0
    %794 = vmatprep.subr.mxu0 0.0
    %795 = vmatpush1.msra.mxu0 0.0
    %796 = vmatprep.subr.mxu0 0.0
    %797 = vmatpush1.msra.mxu0 0.0
    %798 = vmatprep.subr.mxu0 0.0
    %799 = vmatpush1.msra.mxu0 0.0
    %800 = vmatprep.subr.mxu0 0.0
    %801 = vmatpush1.msra.mxu0 0.0
    %802 = vmatprep.subr.mxu0 0.0
    %803 = vmatpush1.msra.mxu0 0.0
    %804 = vmatprep.subr.mxu0 0.0
    %805 = vmatpush1.msra.mxu0 0.0
    %806 = vmatprep.subr.mxu0 0.0
    %807 = vmatpush1.msra.mxu0 0.0
    %808 = vmatprep.subr.mxu0 0.0
    %809 = vmatpush1.msra.mxu0 0.0
    %810 = vmatprep.mubr.f32.mxu0 0.0
    %811 = vmatmul.mubr.f32.gmra.mrb[0].mxu0 %v744
    %v812 = vpop.f32.mrb[0].mxu0
    %v813 = vadd.f32 %v288, %v812
    %v814 = vpop.f32.mrb[0].mxu0
    %815 = vdwg.mxu0
    %v818 = vunpack.c.l.s4 1983009808
    %v819 = vunpack.c.0.s8 %v818
    %v820 = vlaneseq
    %v821 = vshrl.u32 %v820, 7
    %v822 = vsub.s32 %v819, %v821
    %v823 = vrot.slane %v813, %v822
    %824 = vrot.lane.b32.xlu0 %v823, 96
    %v825 = vpop.permute.xlu0 %824
    %vm827 = vcmask 976640
    %828 = vst.msk [vmem:[#allocation2] sm:$0x3] %vm827, %v825
    %829 = vset.pattern.permute.xlu0 5
    %830 = vperm.xlu0 %829, %v235
    %v831 = vpop.permute.xlu0 %830
    %v833 = vmul.f32 %v831, %v244
    %v834 = vadd.f32 %v223, %v833
    %835 = vset.pattern.permute.xlu0 11
    %836 = vperm.xlu0 %835, %v235
    %v837 = vpop.permute.xlu0 %836
    %v839 = vmul.f32 %v837, %v254
    %v840 = vadd.f32 %v834, %v839
    %v841 = vsel %vm257, %v840, 0.0
    %842 = vadd.xlane.f32.xlu0 %v841
    %v843 = vpop.xlane.xlu0 %842
    %v844 = vmul.f32 %v843, %v261
    %v845 = vsub.f32 %v840, %v844
    %v846 = vmul.f32 %v845, %v845
    %v847 = vsel %vm257, %v846, 0.0
    %848 = vadd.xlane.f32.xlu0 %v847
    %v849 = vpop.xlane.xlu0 %848
    %v850 = vmul.f32 %v849, %v261
    %v851 = vadd.f32 %v850, 1e-05
    %v852 = vrsqrt.pop %v851
    %v853 = vmul.f32 %v845, %v852
    %v854 = vmul.f32 %v853, %v275
    %v855 = vadd.f32 %v854, %v280
    %vm856 = vcmp.gt.f32.partialorder %v855, 0.0
    %v857 = vmul.f32 %v855, 0.01
    %v858 = vsel %vm856, %v855, %v857
    %v860 = vsel %vm289, %v858, 0
    %862 = vmatprep.subr.mxu0 0.0
    %863 = vmatpush1.msra.mxu0 %v227
    %864 = vmatprep.subr.mxu0 0.0
    %865 = vmatpush1.msra.mxu0 %v228
    %866 = vmatprep.subr.mxu0 0.0
    %867 = vmatpush1.msra.mxu0 %v229
    %868 = vmatprep.subr.mxu0 0.0
    %869 = vmatpush1.msra.mxu0 %v230
    %870 = vmatprep.subr.mxu0 0.0
    %871 = vmatpush1.msra.mxu0 %v231
    %872 = vmatprep.subr.mxu0 0.0
    %873 = vmatpush1.msra.mxu0 %v232
    %874 = vmatprep.subr.mxu0 0.0
    %875 = vmatpush1.msra.mxu0 %v233
    %876 = vmatprep.subr.mxu0 0.0
    %877 = vmatpush1.msra.mxu0 %v234
    %878 = vmatprep.subr.mxu0 0.0
    %879 = vmatpush1.msra.mxu0 0.0
    %880 = vmatprep.subr.mxu0 0.0
    %881 = vmatpush1.msra.mxu0 0.0
    %882 = vmatprep.subr.mxu0 0.0
    %883 = vmatpush1.msra.mxu0 0.0
    %884 = vmatprep.subr.mxu0 0.0
    %885 = vmatpush1.msra.mxu0 0.0
    %886 = vmatprep.subr.mxu0 0.0
    %887 = vmatpush1.msra.mxu0 0.0
    %888 = vmatprep.subr.mxu0 0.0
    %889 = vmatpush1.msra.mxu0 0.0
    %890 = vmatprep.subr.mxu0 0.0
    %891 = vmatpush1.msra.mxu0 0.0
    %892 = vmatprep.subr.mxu0 0.0
    %893 = vmatpush1.msra.mxu0 0.0
    %894 = vmatprep.subr.mxu0 0.0
    %895 = vmatpush1.msra.mxu0 0.0
    %896 = vmatprep.subr.mxu0 0.0
    %897 = vmatpush1.msra.mxu0 0.0
    %898 = vmatprep.subr.mxu0 0.0
    %899 = vmatpush1.msra.mxu0 0.0
    %900 = vmatprep.subr.mxu0 0.0
    %901 = vmatpush1.msra.mxu0 0.0
    %902 = vmatprep.subr.mxu0 0.0
    %903 = vmatpush1.msra.mxu0 0.0
    %904 = vmatprep.subr.mxu0 0.0
    %905 = vmatpush1.msra.mxu0 0.0
    %906 = vmatprep.subr.mxu0 0.0
    %907 = vmatpush1.msra.mxu0 0.0
    %908 = vmatprep.subr.mxu0 0.0
    %909 = vmatpush1.msra.mxu0 0.0
    %910 = vmatprep.subr.mxu0 0.0
    %911 = vmatpush1.msra.mxu0 0.0
    %912 = vmatprep.subr.mxu0 0.0
    %913 = vmatpush1.msra.mxu0 0.0
    %914 = vmatprep.subr.mxu0 0.0
    %915 = vmatpush1.msra.mxu0 0.0
    %916 = vmatprep.subr.mxu0 0.0
    %917 = vmatpush1.msra.mxu0 0.0
    %918 = vmatprep.subr.mxu0 0.0
    %919 = vmatpush1.msra.mxu0 0.0
    %920 = vmatprep.subr.mxu0 0.0
    %921 = vmatpush1.msra.mxu0 0.0
    %922 = vmatprep.subr.mxu0 0.0
    %923 = vmatpush1.msra.mxu0 0.0
    %924 = vmatprep.subr.mxu0 0.0
    %925 = vmatpush1.msra.mxu0 0.0
    %926 = vmatprep.mubr.f32.mxu0 0.0
    %927 = vmatmul.mubr.f32.gmra.mrb[0].mxu0 %v860
    %v928 = vpop.f32.mrb[0].mxu0
    %v929 = vadd.f32 %v288, %v928
    %v930 = vpop.f32.mrb[0].mxu0
    %931 = vdwg.mxu0
    %v934 = vunpack.c.l.s4 1983009808
    %v935 = vunpack.c.0.s8 %v934
    %v936 = vlaneseq
    %v937 = vshrl.u32 %v936, 7
    %v938 = vsub.s32 %v935, %v937
    %v939 = vrot.slane %v929, %v938
    %940 = vrot.lane.b32.xlu0 %v939, 120
    %v941 = vpop.permute.xlu0 %940
    %v942 = vrot.slane %v941, 6
    %vm943 = vcmask 982016
    %v944 = vsel %vm943, %v942, %v941
    %vm946 = vcmask 1042368
    %vm947 = vcmask 125954
    %vm948 = vmor %vm947, %vm946
    %949 = vst.msk [vmem:[#allocation2] sm:$0xf] %vm948, %v944
    // Predicated region
    $region30: #{tpu_custom_call.1} parent=1 // pred_check
      _
    $region31: #{tpu_custom_call.1} parent=1 // pred_check_branch
      %951 = sbr.rel (0) target = $region33
    $region32: #{tpu_custom_call.1} parent=1 // pred_region
      %s953 = ssub.s32 64, 64
      %954 = vsyncadd [#allocation3], %s953
      %s956 = sshll.u32 [#allocation2], 4
      %s957 = int_to_ptr.vmem [resolvable:$true] %s956
      %959 = dma.vmem_to_hbm [thread:$0]  %s957, 64, %s7, [#allocation3]
    $region33: #{tpu_custom_call.1} parent=1 // pred_fallthru
      _
    // Predicated region
    $region34: #{tpu_custom_call.1} parent=1 // pred_check
      _
    $region35: #{tpu_custom_call.1} parent=1 // pred_check_branch
      %961 = sbr.rel (0) target = $region37
    $region36: #{tpu_custom_call.1} parent=1 // pred_region
      %962 = dma.done [#allocation3], 64
    $region37: #{tpu_custom_call.1} parent=1 // pred_fallthru
      _
    %963 = vsyncpa [#allocation3], 1

</llo_original>
